<compile_context>
chip_gen: v6e
topology: v6e:2x2x1
jax: 0.10.0
libtpu: 0.0.40
codegen_flags: <defaults>
</compile_context>

<pallas_src>
import math
import jax
import jax.numpy as jnp
from jax.experimental import pallas as pl
from jax.experimental.pallas import tpu as pltpu

# ----- small synthetic BERT config (bert-base structure, tiny sizes) --------
VOCAB      = 128
TYPE_VOCAB = 2
MAX_POS    = 16
HIDDEN     = 32
HEADS      = 4
HEAD_DIM   = HIDDEN // HEADS
INTER      = 64          # 4 * hidden
LAYERS     = 2
OUT_DIM    = 3           # NLI: entailment / neutral / contradiction
B          = 2
S          = 8
LN_EPS     = 1e-12       # HF BERT layer-norm eps


# ----------------------------- in-kernel helpers -----------------------------
def _gelu(x):
    # TODO(synk): HF BERT uses exact (erf) GELU; tanh approximation used here
    # for robust Mosaic lowering (difference is < 1e-3 relative).
    c = math.sqrt(2.0 / math.pi)
    return 0.5 * x * (1.0 + jnp.tanh(c * (x + 0.044715 * x * x * x)))


def _layernorm(x, g, b):
    mu = jnp.mean(x, axis=-1, keepdims=True)
    var = jnp.mean((x - mu) * (x - mu), axis=-1, keepdims=True)
    return (x - mu) * jax.lax.rsqrt(var + LN_EPS) * g + b


def _mm(x_f32, w_bf16_ref, b_f32_ref):
    """bf16 x bf16 matmul with f32 accumulation + bias."""
    return jnp.dot(x_f32.astype(jnp.bfloat16), w_bf16_ref[...],
                   preferred_element_type=jnp.float32) + b_f32_ref[...]


# ------------------------------- fused kernel --------------------------------
def _bert_stack_kernel(emb_ref, mask_ref, eg_ref, eb_ref,
                       qkvw_ref, qkvb_ref, aow_ref, aob_ref,
                       ln1g_ref, ln1b_ref, iw_ref, ib_ref,
                       ow_ref, ob_ref, ln2g_ref, ln2b_ref,
                       pw_ref, pb_ref, cw_ref, cb_ref,
                       logits_ref, h_ref):
    l = pl.program_id(0)

    # --- step 0: embedding LayerNorm into the resident activation scratch ---
    @pl.when(l == 0)
    def _():
        h_ref[...] = _layernorm(emb_ref[...], eg_ref[...], eb_ref[...])

    h = h_ref[...]                                            # (B*S, HIDDEN) f32

    # --- fused QKV projection: one (HIDDEN, 3*HIDDEN) matmul -----------------
    qkv = _mm(h, qkvw_ref, qkvb_ref)                          # (B*S, 3*HIDDEN)
    q = qkv[:, 0:HIDDEN]
    k = qkv[:, HIDDEN:2 * HIDDEN]
    v = qkv[:, 2 * HIDDEN:3 * HIDDEN]

    # --- multi-head self-attention (in-kernel head split/merge) -------------
    mask = mask_ref[...]                                      # (B, 1, S) additive
    scale = 1.0 / math.sqrt(HEAD_DIM)
    ctx_heads = []
    for hh in range(HEADS):
        lo, hi = hh * HEAD_DIM, (hh + 1) * HEAD_DIM
        qh = q[:, lo:hi].reshape(B, S, HEAD_DIM)
        kh = k[:, lo:hi].reshape(B, S, HEAD_DIM)
        vh = v[:, lo:hi].reshape(B, S, HEAD_DIM)
        s = jnp.einsum('bqd,bkd->bqk',
                       qh.astype(jnp.bfloat16), kh.astype(jnp.bfloat16),
                       preferred_element_type=jnp.float32) * scale
        s = s + mask
        s = s - jnp.max(s, axis=-1, keepdims=True)
        p = jnp.exp(s)
        p = p * pl.reciprocal(jnp.sum(p, axis=-1, keepdims=True), approx=True)
        ch = jnp.einsum('bqk,bkd->bqd',
                        p.astype(jnp.bfloat16), vh.astype(jnp.bfloat16),
                        preferred_element_type=jnp.float32)
        ctx_heads.append(ch.reshape(B * S, HEAD_DIM))
    ctx = jnp.concatenate(ctx_heads, axis=-1)                 # (B*S, HIDDEN)

    # --- attention output proj + residual + LN1 ------------------------------
    attn_out = _mm(ctx, aow_ref, aob_ref)
    h1 = _layernorm(attn_out + h, ln1g_ref[...], ln1b_ref[...])

    # --- FFN (GELU) + residual + LN2 -----------------------------------------
    inter = _gelu(_mm(h1, iw_ref, ib_ref))
    ff = _mm(inter, ow_ref, ob_ref)
    h2 = _layernorm(ff + h1, ln2g_ref[...], ln2b_ref[...])
    h_ref[...] = h2                                           # carry to next layer

    # --- last layer: pooler (tanh on [CLS]) + NLI classifier -----------------
    @pl.when(l == LAYERS - 1)
    def _():
        cls = jnp.concatenate([h2[b * S:b * S + 1, :] for b in range(B)],
                              axis=0)                         # (B, HIDDEN)
        pooled = jnp.tanh(_mm(cls, pw_ref, pb_ref))           # (B, HIDDEN)
        logits_ref[...] = jnp.dot(pooled, cw_ref[...],
                                  preferred_element_type=jnp.float32) + cb_ref[...]


# ------------------------------ pallas wrapper --------------------------------
def _const_spec(shape):
    n = len(shape)
    return pl.BlockSpec(shape, lambda l, n=n: (0,) * n)


def _layer_spec(shape):
    n = len(shape)
    return pl.BlockSpec((None,) + shape, lambda l, n=n: (l,) + (0,) * n)


def bert_nli_forward(params, input_ids, attn_mask, token_type):
    # --- embeddings: the table gathers stay as XLA glue (single tiny op) ----
    # TODO(synk): embedding lookups (gathers) are done outside the kernel.
    pos_ids = jnp.arange(S)
    emb = (params['word_emb'][input_ids]
           + params['pos_emb'][pos_ids][None, :, :]
           + params['type_emb'][token_type]).reshape(B * S, HIDDEN)

    # HF-style extended additive attention mask: (1 - m) * -10000, (B, 1, S)
    ext = ((1.0 - attn_mask.astype(jnp.float32)) * -10000.0)[:, None, :]

    grid_spec = pltpu.PrefetchScalarGridSpec(
        num_scalar_prefetch=0,
        grid=(LAYERS,),
        in_specs=[
            _const_spec((B * S, HIDDEN)),        # emb
            _const_spec((B, 1, S)),              # additive mask
            _const_spec((1, HIDDEN)),            # emb_ln_g
            _const_spec((1, HIDDEN)),            # emb_ln_b
            _layer_spec((HIDDEN, 3 * HIDDEN)),   # qkv_w
            _layer_spec((1, 3 * HIDDEN)),        # qkv_b
            _layer_spec((HIDDEN, HIDDEN)),       # ao_w
            _layer_spec((1, HIDDEN)),            # ao_b
            _layer_spec((1, HIDDEN)),            # ln1_g
            _layer_spec((1, HIDDEN)),            # ln1_b
            _layer_spec((HIDDEN, INTER)),        # i_w
            _layer_spec((1, INTER)),             # i_b
            _layer_spec((INTER, HIDDEN)),        # o_w
            _layer_spec((1, HIDDEN)),            # o_b
            _layer_spec((1, HIDDEN)),            # ln2_g
            _layer_spec((1, HIDDEN)),            # ln2_b
            _const_spec((HIDDEN, HIDDEN)),       # pooler_w
            _const_spec((1, HIDDEN)),            # pooler_b
            _const_spec((HIDDEN, OUT_DIM)),      # out_w
            _const_spec((1, OUT_DIM)),           # out_b
        ],
        out_specs=pl.BlockSpec((B, OUT_DIM), lambda l: (0, 0)),
        scratch_shapes=[pltpu.VMEM((B * S, HIDDEN), jnp.float32)],
    )

    logits = pl.pallas_call(
        _bert_stack_kernel,
        out_shape=jax.ShapeDtypeStruct((B, OUT_DIM), jnp.float32),
        grid_spec=grid_spec,
        compiler_params=pltpu.CompilerParams(
            dimension_semantics=("arbitrary",)),   # layers are sequential
    )(emb, ext,
      params['emb_ln_g'], params['emb_ln_b'],
      params['qkv_w'], params['qkv_b'], params['ao_w'], params['ao_b'],
      params['ln1_g'], params['ln1_b'], params['i_w'], params['i_b'],
      params['o_w'], params['o_b'], params['ln2_g'], params['ln2_b'],
      params['pooler_w'], params['pooler_b'], params['out_w'], params['out_b'])
    return logits


# ------------------------------ parameter init -------------------------------
def init_params(key):
    def w(k, shape):
        return 0.02 * jax.random.normal(k, shape, jnp.float32)

    ks = iter(jax.random.split(key, 16))
    return {
        'word_emb': w(next(ks), (VOCAB, HIDDEN)),
        'pos_emb':  w(next(ks), (MAX_POS, HIDDEN)),
        'type_emb': w(next(ks), (TYPE_VOCAB, HIDDEN)),
        'emb_ln_g': jnp.ones((1, HIDDEN), jnp.float32),
        'emb_ln_b': jnp.zeros((1, HIDDEN), jnp.float32),
        # stacked per-layer weights; matmul weights stored bf16 (f32 accumulate)
        'qkv_w': w(next(ks), (LAYERS, HIDDEN, 3 * HIDDEN)).astype(jnp.bfloat16),
        'qkv_b': jnp.zeros((LAYERS, 1, 3 * HIDDEN), jnp.float32),
        'ao_w':  w(next(ks), (LAYERS, HIDDEN, HIDDEN)).astype(jnp.bfloat16),
        'ao_b':  jnp.zeros((LAYERS, 1, HIDDEN), jnp.float32),
        'ln1_g': jnp.ones((LAYERS, 1, HIDDEN), jnp.float32),
        'ln1_b': jnp.zeros((LAYERS, 1, HIDDEN), jnp.float32),
        'i_w':   w(next(ks), (LAYERS, HIDDEN, INTER)).astype(jnp.bfloat16),
        'i_b':   jnp.zeros((LAYERS, 1, INTER), jnp.float32),
        'o_w':   w(next(ks), (LAYERS, INTER, HIDDEN)).astype(jnp.bfloat16),
        'o_b':   jnp.zeros((LAYERS, 1, HIDDEN), jnp.float32),
        'ln2_g': jnp.ones((LAYERS, 1, HIDDEN), jnp.float32),
        'ln2_b': jnp.zeros((LAYERS, 1, HIDDEN), jnp.float32),
        'pooler_w': w(next(ks), (HIDDEN, HIDDEN)).astype(jnp.bfloat16),
        'pooler_b': jnp.zeros((1, HIDDEN), jnp.float32),
        'out_w': w(next(ks), (HIDDEN, OUT_DIM)),
        'out_b': jnp.zeros((1, OUT_DIM), jnp.float32),
    }


# ------------------------------------ main ------------------------------------
if __name__ == "__main__":
    key = jax.random.PRNGKey(0)
    pkey, ikey = jax.random.split(key)
    params = init_params(pkey)

    # deterministic example inputs (ids / mask / segment ids), shape (B, S)
    input_ids = jax.random.randint(ikey, (B, S), 0, VOCAB, dtype=jnp.int32)
    attn_mask = jnp.array([[1] * S,
                           [1] * (S - 2) + [0, 0]], dtype=jnp.int32)
    token_type = jnp.array([[0] * (S // 2) + [1] * (S // 2)] * B, dtype=jnp.int32)

    fwd = jax.jit(bert_nli_forward)
    logits = fwd(params, input_ids, attn_mask, token_type)
    jax.block_until_ready(logits)
    assert logits.shape == (B, OUT_DIM) and logits.dtype == jnp.float32
    assert bool(jnp.all(jnp.isfinite(logits)))
    print("KERNEL_OK")
</pallas_src>

<mosaic_0001>
module attributes {stable_mosaic.version = 11 : i64} {
  func.func @_bert_stack_kernel(%arg0: i32, %arg1: memref<16x32xf32, #tpu.memory_space<vmem>>, %arg2: memref<2x1x8xf32, #tpu.memory_space<vmem>>, %arg3: memref<1x32xf32, #tpu.memory_space<vmem>>, %arg4: memref<1x32xf32, #tpu.memory_space<vmem>>, %arg5: memref<1x32x96xbf16, #tpu.memory_space<vmem>>, %arg6: memref<1x1x96xf32, #tpu.memory_space<vmem>>, %arg7: memref<1x32x32xbf16, #tpu.memory_space<vmem>>, %arg8: memref<1x1x32xf32, #tpu.memory_space<vmem>>, %arg9: memref<1x1x32xf32, #tpu.memory_space<vmem>>, %arg10: memref<1x1x32xf32, #tpu.memory_space<vmem>>, %arg11: memref<1x32x64xbf16, #tpu.memory_space<vmem>>, %arg12: memref<1x1x64xf32, #tpu.memory_space<vmem>>, %arg13: memref<1x64x32xbf16, #tpu.memory_space<vmem>>, %arg14: memref<1x1x32xf32, #tpu.memory_space<vmem>>, %arg15: memref<1x1x32xf32, #tpu.memory_space<vmem>>, %arg16: memref<1x1x32xf32, #tpu.memory_space<vmem>>, %arg17: memref<32x32xbf16, #tpu.memory_space<vmem>>, %arg18: memref<1x32xf32, #tpu.memory_space<vmem>>, %arg19: memref<32x3xf32, #tpu.memory_space<vmem>>, %arg20: memref<1x3xf32, #tpu.memory_space<vmem>>, %arg21: memref<2x3xf32, #tpu.memory_space<vmem>>, %arg22: memref<16x32xf32, #tpu.memory_space<vmem>>) attributes {dimension_semantics = [#tpu.dimension_semantics<arbitrary>], iteration_bounds = array<i64: 2>, scalar_prefetch = 0 : i64, scratch_operands = 1 : i64, tpu.core_type = #tpu.core_type<tc>, window_params = [{pipeline_mode = #tpu.pipeline_mode<synchronous>, transform_indices = @transform_0, window_bounds = array<i64: 16, 32>}, {pipeline_mode = #tpu.pipeline_mode<synchronous>, transform_indices = @transform_1, window_bounds = array<i64: 2, 1, 8>}, {pipeline_mode = #tpu.pipeline_mode<synchronous>, transform_indices = @transform_2, window_bounds = array<i64: 1, 32>}, {pipeline_mode = #tpu.pipeline_mode<synchronous>, transform_indices = @transform_3, window_bounds = array<i64: 1, 32>}, {transform_indices = @transform_4, window_bounds = array<i64: 1, 32, 96>}, {transform_indices = @transform_5, window_bounds = array<i64: 1, 1, 96>}, {transform_indices = @transform_6, window_bounds = array<i64: 1, 32, 32>}, {transform_indices = @transform_7, window_bounds = array<i64: 1, 1, 32>}, {transform_indices = @transform_8, window_bounds = array<i64: 1, 1, 32>}, {transform_indices = @transform_9, window_bounds = array<i64: 1, 1, 32>}, {transform_indices = @transform_10, window_bounds = array<i64: 1, 32, 64>}, {transform_indices = @transform_11, window_bounds = array<i64: 1, 1, 64>}, {transform_indices = @transform_12, window_bounds = array<i64: 1, 64, 32>}, {transform_indices = @transform_13, window_bounds = array<i64: 1, 1, 32>}, {transform_indices = @transform_14, window_bounds = array<i64: 1, 1, 32>}, {transform_indices = @transform_15, window_bounds = array<i64: 1, 1, 32>}, {pipeline_mode = #tpu.pipeline_mode<synchronous>, transform_indices = @transform_16, window_bounds = array<i64: 32, 32>}, {pipeline_mode = #tpu.pipeline_mode<synchronous>, transform_indices = @transform_17, window_bounds = array<i64: 1, 32>}, {pipeline_mode = #tpu.pipeline_mode<synchronous>, transform_indices = @transform_18, window_bounds = array<i64: 32, 3>}, {pipeline_mode = #tpu.pipeline_mode<synchronous>, transform_indices = @transform_19, window_bounds = array<i64: 1, 3>}, {pipeline_mode = #tpu.pipeline_mode<synchronous>, transform_indices = @transform_20, window_bounds = array<i64: 2, 3>}]} {
    %c0_i32 = arith.constant 0 : i32
    %0 = arith.cmpi eq, %arg0, %c0_i32 : i32
    %1 = arith.extui %0 : i1 to i32
    %c0_i32_0 = arith.constant 0 : i32
    %2 = arith.cmpi ne, %1, %c0_i32_0 : i32
    scf.if %2 {
      %c0_81 = arith.constant 0 : index
      %c0_82 = arith.constant 0 : index
      %224 = vector.load %arg1[%c0_81, %c0_82] : memref<16x32xf32, #tpu.memory_space<vmem>>, vector<16x32xf32>
      %c0_83 = arith.constant 0 : index
      %c0_84 = arith.constant 0 : index
      %225 = vector.load %arg3[%c0_83, %c0_84] : memref<1x32xf32, #tpu.memory_space<vmem>>, vector<1x32xf32>
      %c0_85 = arith.constant 0 : index
      %c0_86 = arith.constant 0 : index
      %226 = vector.load %arg4[%c0_85, %c0_86] : memref<1x32xf32, #tpu.memory_space<vmem>>, vector<1x32xf32>
      %cst_87 = arith.constant dense<0.000000e+00> : vector<16xf32>
      %227 = vector.multi_reduction <add>, %224, %cst_87 [1] : vector<16x32xf32> to vector<16xf32>
      %228 = vector.shape_cast %227 : vector<16xf32> to vector<16x1xf32>
      %cst_88 = arith.constant 3.200000e+01 : f32
      %229 = vector.broadcast %cst_88 : f32 to vector<16x1xf32>
      %230 = arith.divf %228, %229 : vector<16x1xf32>
      %231 = vector.broadcast %230 : vector<16x1xf32> to vector<16x32xf32>
      %232 = arith.subf %224, %231 : vector<16x32xf32>
      %233 = vector.broadcast %230 : vector<16x1xf32> to vector<16x32xf32>
      %234 = arith.subf %224, %233 : vector<16x32xf32>
      %235 = arith.mulf %232, %234 : vector<16x32xf32>
      %cst_89 = arith.constant dense<0.000000e+00> : vector<16xf32>
      %236 = vector.multi_reduction <add>, %235, %cst_89 [1] : vector<16x32xf32> to vector<16xf32>
      %237 = vector.shape_cast %236 : vector<16xf32> to vector<16x1xf32>
      %cst_90 = arith.constant 3.200000e+01 : f32
      %238 = vector.broadcast %cst_90 : f32 to vector<16x1xf32>
      %239 = arith.divf %237, %238 : vector<16x1xf32>
      %240 = vector.broadcast %230 : vector<16x1xf32> to vector<16x32xf32>
      %241 = arith.subf %224, %240 : vector<16x32xf32>
      %cst_91 = arith.constant 9.99999996E-13 : f32
      %242 = vector.broadcast %cst_91 : f32 to vector<16x1xf32>
      %243 = arith.addf %239, %242 : vector<16x1xf32>
      %244 = math.rsqrt %243 : vector<16x1xf32>
      %245 = vector.broadcast %244 : vector<16x1xf32> to vector<16x32xf32>
      %246 = arith.mulf %241, %245 : vector<16x32xf32>
      %247 = vector.broadcast %225 : vector<1x32xf32> to vector<16x32xf32>
      %248 = arith.mulf %246, %247 : vector<16x32xf32>
      %249 = vector.broadcast %226 : vector<1x32xf32> to vector<16x32xf32>
      %250 = arith.addf %248, %249 : vector<16x32xf32>
      %c0_92 = arith.constant 0 : index
      %c0_93 = arith.constant 0 : index
      %251 = vector.load %arg22[%c0_92, %c0_93] : memref<16x32xf32, #tpu.memory_space<vmem>>, vector<16x32xf32>
      tpu.vector_store %arg22[%c0_92, %c0_93], %250 {strides = array<i32>} : memref<16x32xf32, #tpu.memory_space<vmem>>, vector<16x32xf32>,
    } else {
    }
    %c0 = arith.constant 0 : index
    %c0_1 = arith.constant 0 : index
    %3 = vector.load %arg22[%c0, %c0_1] : memref<16x32xf32, #tpu.memory_space<vmem>>, vector<16x32xf32>
    %4 = arith.truncf %3 : vector<16x32xf32> to vector<16x32xbf16>
    %c0_2 = arith.constant 0 : index
    %c0_3 = arith.constant 0 : index
    %c0_4 = arith.constant 0 : index
    %5 = vector.load %arg5[%c0_2, %c0_3, %c0_4] : memref<1x32x96xbf16, #tpu.memory_space<vmem>>, vector<1x32x96xbf16>
    %6 = vector.shape_cast %5 : vector<1x32x96xbf16> to vector<32x96xbf16>
    %cst = arith.constant dense<0.000000e+00> : vector<16x96xf32>
    %7 = tpu.matmul %4, %6, %cst {dimension_numbers = #tpu.dot_dimension_numbers<[1], [0], [0], [1], [0, 0, 1, 1], [], []>} : vector<16x32xbf16>, vector<32x96xbf16>, vector<16x96xf32> -> vector<16x96xf32>
    %c0_5 = arith.constant 0 : index
    %c0_6 = arith.constant 0 : index
    %c0_7 = arith.constant 0 : index
    %8 = vector.load %arg6[%c0_5, %c0_6, %c0_7] : memref<1x1x96xf32, #tpu.memory_space<vmem>>, vector<1x1x96xf32>
    %9 = vector.shape_cast %8 : vector<1x1x96xf32> to vector<1x96xf32>
    %10 = vector.broadcast %9 : vector<1x96xf32> to vector<16x96xf32>
    %11 = arith.addf %7, %10 : vector<16x96xf32>
    %12 = vector.extract_strided_slice %11 {offsets = [0, 0], sizes = [16, 32], strides = [1, 1]} : vector<16x96xf32> to vector<16x32xf32>
    %13 = vector.extract_strided_slice %11 {offsets = [0, 32], sizes = [16, 32], strides = [1, 1]} : vector<16x96xf32> to vector<16x32xf32>
    %14 = vector.extract_strided_slice %11 {offsets = [0, 64], sizes = [16, 32], strides = [1, 1]} : vector<16x96xf32> to vector<16x32xf32>
    %c0_8 = arith.constant 0 : index
    %c0_9 = arith.constant 0 : index
    %c0_10 = arith.constant 0 : index
    %15 = vector.load %arg2[%c0_8, %c0_9, %c0_10] : memref<2x1x8xf32, #tpu.memory_space<vmem>>, vector<2x1x8xf32>
    %16 = vector.extract_strided_slice %12 {offsets = [0, 0], sizes = [16, 8], strides = [1, 1]} : vector<16x32xf32> to vector<16x8xf32>
    %17 = vector.shape_cast %16 : vector<16x8xf32> to vector<2x8x8xf32>
    %18 = vector.extract_strided_slice %13 {offsets = [0, 0], sizes = [16, 8], strides = [1, 1]} : vector<16x32xf32> to vector<16x8xf32>
    %19 = vector.shape_cast %18 : vector<16x8xf32> to vector<2x8x8xf32>
    %20 = vector.extract_strided_slice %14 {offsets = [0, 0], sizes = [16, 8], strides = [1, 1]} : vector<16x32xf32> to vector<16x8xf32>
    %21 = vector.shape_cast %20 : vector<16x8xf32> to vector<2x8x8xf32>
    %22 = arith.truncf %17 : vector<2x8x8xf32> to vector<2x8x8xbf16>
    %23 = arith.truncf %19 : vector<2x8x8xf32> to vector<2x8x8xbf16>
    "tpu.trace_start"() <{level = 10 : i32, message = "bqd,bkd->bqk"}> : () -> ()
    %cst_11 = arith.constant dense<0.000000e+00> : vector<2x8x8xf32>
    %24 = tpu.matmul %22, %23, %cst_11 {dimension_numbers = #tpu.dot_dimension_numbers<[2], [2], [1], [1], [0, 0, 0, 1, 1, 1], [0], [0]>} : vector<2x8x8xbf16>, vector<2x8x8xbf16>, vector<2x8x8xf32> -> vector<2x8x8xf32>
    "tpu.trace_stop"() : () -> ()
    %cst_12 = arith.constant 0.353553385 : f32
    %25 = vector.broadcast %cst_12 : f32 to vector<2x8x8xf32>
    %26 = arith.mulf %24, %25 : vector<2x8x8xf32>
    %27 = vector.broadcast %15 : vector<2x1x8xf32> to vector<2x8x8xf32>
    %28 = arith.addf %26, %27 : vector<2x8x8xf32>
    %cst_13 = arith.constant dense<0xFF800000> : vector<2x8xf32>
    %29 = vector.multi_reduction <maximumf>, %28, %cst_13 [2] : vector<2x8x8xf32> to vector<2x8xf32>
    %30 = vector.shape_cast %29 : vector<2x8xf32> to vector<2x8x1xf32>
    %31 = vector.broadcast %30 : vector<2x8x1xf32> to vector<2x8x8xf32>
    %32 = arith.subf %28, %31 : vector<2x8x8xf32>
    %33 = math.exp %32 : vector<2x8x8xf32>
    %cst_14 = arith.constant dense<0.000000e+00> : vector<2x8xf32>
    %34 = vector.multi_reduction <add>, %33, %cst_14 [2] : vector<2x8x8xf32> to vector<2x8xf32>
    %35 = vector.shape_cast %34 : vector<2x8xf32> to vector<2x8x1xf32>
    %36 = tpu.reciprocal %35 {approx = true} : vector<2x8x1xf32> -> vector<2x8x1xf32>
    %37 = vector.broadcast %36 : vector<2x8x1xf32> to vector<2x8x8xf32>
    %38 = arith.mulf %33, %37 : vector<2x8x8xf32>
    %39 = arith.truncf %38 : vector<2x8x8xf32> to vector<2x8x8xbf16>
    %40 = arith.truncf %21 : vector<2x8x8xf32> to vector<2x8x8xbf16>
    "tpu.trace_start"() <{level = 10 : i32, message = "bqk,bkd->bqd"}> : () -> ()
    %cst_15 = arith.constant dense<0.000000e+00> : vector<2x8x8xf32>
    %41 = tpu.matmul %39, %40, %cst_15 {dimension_numbers = #tpu.dot_dimension_numbers<[2], [1], [1], [2], [0, 0, 0, 1, 1, 2], [0], [0]>} : vector<2x8x8xbf16>, vector<2x8x8xbf16>, vector<2x8x8xf32> -> vector<2x8x8xf32>
    "tpu.trace_stop"() : () -> ()
    %42 = vector.shape_cast %41 : vector<2x8x8xf32> to vector<16x8xf32>
    %43 = vector.extract_strided_slice %12 {offsets = [0, 8], sizes = [16, 8], strides = [1, 1]} : vector<16x32xf32> to vector<16x8xf32>
    %44 = vector.shape_cast %43 : vector<16x8xf32> to vector<2x8x8xf32>
    %45 = vector.extract_strided_slice %13 {offsets = [0, 8], sizes = [16, 8], strides = [1, 1]} : vector<16x32xf32> to vector<16x8xf32>
    %46 = vector.shape_cast %45 : vector<16x8xf32> to vector<2x8x8xf32>
    %47 = vector.extract_strided_slice %14 {offsets = [0, 8], sizes = [16, 8], strides = [1, 1]} : vector<16x32xf32> to vector<16x8xf32>
    %48 = vector.shape_cast %47 : vector<16x8xf32> to vector<2x8x8xf32>
    %49 = arith.truncf %44 : vector<2x8x8xf32> to vector<2x8x8xbf16>
    %50 = arith.truncf %46 : vector<2x8x8xf32> to vector<2x8x8xbf16>
    "tpu.trace_start"() <{level = 10 : i32, message = "bqd,bkd->bqk"}> : () -> ()
    %cst_16 = arith.constant dense<0.000000e+00> : vector<2x8x8xf32>
    %51 = tpu.matmul %49, %50, %cst_16 {dimension_numbers = #tpu.dot_dimension_numbers<[2], [2], [1], [1], [0, 0, 0, 1, 1, 1], [0], [0]>} : vector<2x8x8xbf16>, vector<2x8x8xbf16>, vector<2x8x8xf32> -> vector<2x8x8xf32>
    "tpu.trace_stop"() : () -> ()
    %cst_17 = arith.constant 0.353553385 : f32
    %52 = vector.broadcast %cst_17 : f32 to vector<2x8x8xf32>
    %53 = arith.mulf %51, %52 : vector<2x8x8xf32>
    %54 = vector.broadcast %15 : vector<2x1x8xf32> to vector<2x8x8xf32>
    %55 = arith.addf %53, %54 : vector<2x8x8xf32>
    %cst_18 = arith.constant dense<0xFF800000> : vector<2x8xf32>
    %56 = vector.multi_reduction <maximumf>, %55, %cst_18 [2] : vector<2x8x8xf32> to vector<2x8xf32>
    %57 = vector.shape_cast %56 : vector<2x8xf32> to vector<2x8x1xf32>
    %58 = vector.broadcast %57 : vector<2x8x1xf32> to vector<2x8x8xf32>
    %59 = arith.subf %55, %58 : vector<2x8x8xf32>
    %60 = math.exp %59 : vector<2x8x8xf32>
    %cst_19 = arith.constant dense<0.000000e+00> : vector<2x8xf32>
    %61 = vector.multi_reduction <add>, %60, %cst_19 [2] : vector<2x8x8xf32> to vector<2x8xf32>
    %62 = vector.shape_cast %61 : vector<2x8xf32> to vector<2x8x1xf32>
    %63 = tpu.reciprocal %62 {approx = true} : vector<2x8x1xf32> -> vector<2x8x1xf32>
    %64 = vector.broadcast %63 : vector<2x8x1xf32> to vector<2x8x8xf32>
    %65 = arith.mulf %60, %64 : vector<2x8x8xf32>
    %66 = arith.truncf %65 : vector<2x8x8xf32> to vector<2x8x8xbf16>
    %67 = arith.truncf %48 : vector<2x8x8xf32> to vector<2x8x8xbf16>
    "tpu.trace_start"() <{level = 10 : i32, message = "bqk,bkd->bqd"}> : () -> ()
    %cst_20 = arith.constant dense<0.000000e+00> : vector<2x8x8xf32>
    %68 = tpu.matmul %66, %67, %cst_20 {dimension_numbers = #tpu.dot_dimension_numbers<[2], [1], [1], [2], [0, 0, 0, 1, 1, 2], [0], [0]>} : vector<2x8x8xbf16>, vector<2x8x8xbf16>, vector<2x8x8xf32> -> vector<2x8x8xf32>
    "tpu.trace_stop"() : () -> ()
    %69 = vector.shape_cast %68 : vector<2x8x8xf32> to vector<16x8xf32>
    %70 = vector.extract_strided_slice %12 {offsets = [0, 16], sizes = [16, 8], strides = [1, 1]} : vector<16x32xf32> to vector<16x8xf32>
    %71 = vector.shape_cast %70 : vector<16x8xf32> to vector<2x8x8xf32>
    %72 = vector.extract_strided_slice %13 {offsets = [0, 16], sizes = [16, 8], strides = [1, 1]} : vector<16x32xf32> to vector<16x8xf32>
    %73 = vector.shape_cast %72 : vector<16x8xf32> to vector<2x8x8xf32>
    %74 = vector.extract_strided_slice %14 {offsets = [0, 16], sizes = [16, 8], strides = [1, 1]} : vector<16x32xf32> to vector<16x8xf32>
    %75 = vector.shape_cast %74 : vector<16x8xf32> to vector<2x8x8xf32>
    %76 = arith.truncf %71 : vector<2x8x8xf32> to vector<2x8x8xbf16>
    %77 = arith.truncf %73 : vector<2x8x8xf32> to vector<2x8x8xbf16>
    "tpu.trace_start"() <{level = 10 : i32, message = "bqd,bkd->bqk"}> : () -> ()
    %cst_21 = arith.constant dense<0.000000e+00> : vector<2x8x8xf32>
    %78 = tpu.matmul %76, %77, %cst_21 {dimension_numbers = #tpu.dot_dimension_numbers<[2], [2], [1], [1], [0, 0, 0, 1, 1, 1], [0], [0]>} : vector<2x8x8xbf16>, vector<2x8x8xbf16>, vector<2x8x8xf32> -> vector<2x8x8xf32>
    "tpu.trace_stop"() : () -> ()
    %cst_22 = arith.constant 0.353553385 : f32
    %79 = vector.broadcast %cst_22 : f32 to vector<2x8x8xf32>
    %80 = arith.mulf %78, %79 : vector<2x8x8xf32>
    %81 = vector.broadcast %15 : vector<2x1x8xf32> to vector<2x8x8xf32>
    %82 = arith.addf %80, %81 : vector<2x8x8xf32>
    %cst_23 = arith.constant dense<0xFF800000> : vector<2x8xf32>
    %83 = vector.multi_reduction <maximumf>, %82, %cst_23 [2] : vector<2x8x8xf32> to vector<2x8xf32>
    %84 = vector.shape_cast %83 : vector<2x8xf32> to vector<2x8x1xf32>
    %85 = vector.broadcast %84 : vector<2x8x1xf32> to vector<2x8x8xf32>
    %86 = arith.subf %82, %85 : vector<2x8x8xf32>
    %87 = math.exp %86 : vector<2x8x8xf32>
    %cst_24 = arith.constant dense<0.000000e+00> : vector<2x8xf32>
    %88 = vector.multi_reduction <add>, %87, %cst_24 [2] : vector<2x8x8xf32> to vector<2x8xf32>
    %89 = vector.shape_cast %88 : vector<2x8xf32> to vector<2x8x1xf32>
    %90 = tpu.reciprocal %89 {approx = true} : vector<2x8x1xf32> -> vector<2x8x1xf32>
    %91 = vector.broadcast %90 : vector<2x8x1xf32> to vector<2x8x8xf32>
    %92 = arith.mulf %87, %91 : vector<2x8x8xf32>
    %93 = arith.truncf %92 : vector<2x8x8xf32> to vector<2x8x8xbf16>
    %94 = arith.truncf %75 : vector<2x8x8xf32> to vector<2x8x8xbf16>
    "tpu.trace_start"() <{level = 10 : i32, message = "bqk,bkd->bqd"}> : () -> ()
    %cst_25 = arith.constant dense<0.000000e+00> : vector<2x8x8xf32>
    %95 = tpu.matmul %93, %94, %cst_25 {dimension_numbers = #tpu.dot_dimension_numbers<[2], [1], [1], [2], [0, 0, 0, 1, 1, 2], [0], [0]>} : vector<2x8x8xbf16>, vector<2x8x8xbf16>, vector<2x8x8xf32> -> vector<2x8x8xf32>
    "tpu.trace_stop"() : () -> ()
    %96 = vector.shape_cast %95 : vector<2x8x8xf32> to vector<16x8xf32>
    %97 = vector.extract_strided_slice %12 {offsets = [0, 24], sizes = [16, 8], strides = [1, 1]} : vector<16x32xf32> to vector<16x8xf32>
    %98 = vector.shape_cast %97 : vector<16x8xf32> to vector<2x8x8xf32>
    %99 = vector.extract_strided_slice %13 {offsets = [0, 24], sizes = [16, 8], strides = [1, 1]} : vector<16x32xf32> to vector<16x8xf32>
    %100 = vector.shape_cast %99 : vector<16x8xf32> to vector<2x8x8xf32>
    %101 = vector.extract_strided_slice %14 {offsets = [0, 24], sizes = [16, 8], strides = [1, 1]} : vector<16x32xf32> to vector<16x8xf32>
    %102 = vector.shape_cast %101 : vector<16x8xf32> to vector<2x8x8xf32>
    %103 = arith.truncf %98 : vector<2x8x8xf32> to vector<2x8x8xbf16>
    %104 = arith.truncf %100 : vector<2x8x8xf32> to vector<2x8x8xbf16>
    "tpu.trace_start"() <{level = 10 : i32, message = "bqd,bkd->bqk"}> : () -> ()
    %cst_26 = arith.constant dense<0.000000e+00> : vector<2x8x8xf32>
    %105 = tpu.matmul %103, %104, %cst_26 {dimension_numbers = #tpu.dot_dimension_numbers<[2], [2], [1], [1], [0, 0, 0, 1, 1, 1], [0], [0]>} : vector<2x8x8xbf16>, vector<2x8x8xbf16>, vector<2x8x8xf32> -> vector<2x8x8xf32>
    "tpu.trace_stop"() : () -> ()
    %cst_27 = arith.constant 0.353553385 : f32
    %106 = vector.broadcast %cst_27 : f32 to vector<2x8x8xf32>
    %107 = arith.mulf %105, %106 : vector<2x8x8xf32>
    %108 = vector.broadcast %15 : vector<2x1x8xf32> to vector<2x8x8xf32>
    %109 = arith.addf %107, %108 : vector<2x8x8xf32>
    %cst_28 = arith.constant dense<0xFF800000> : vector<2x8xf32>
    %110 = vector.multi_reduction <maximumf>, %109, %cst_28 [2] : vector<2x8x8xf32> to vector<2x8xf32>
    %111 = vector.shape_cast %110 : vector<2x8xf32> to vector<2x8x1xf32>
    %112 = vector.broadcast %111 : vector<2x8x1xf32> to vector<2x8x8xf32>
    %113 = arith.subf %109, %112 : vector<2x8x8xf32>
    %114 = math.exp %113 : vector<2x8x8xf32>
    %cst_29 = arith.constant dense<0.000000e+00> : vector<2x8xf32>
    %115 = vector.multi_reduction <add>, %114, %cst_29 [2] : vector<2x8x8xf32> to vector<2x8xf32>
    %116 = vector.shape_cast %115 : vector<2x8xf32> to vector<2x8x1xf32>
    %117 = tpu.reciprocal %116 {approx = true} : vector<2x8x1xf32> -> vector<2x8x1xf32>
    %118 = vector.broadcast %117 : vector<2x8x1xf32> to vector<2x8x8xf32>
    %119 = arith.mulf %114, %118 : vector<2x8x8xf32>
    %120 = arith.truncf %119 : vector<2x8x8xf32> to vector<2x8x8xbf16>
    %121 = arith.truncf %102 : vector<2x8x8xf32> to vector<2x8x8xbf16>
    "tpu.trace_start"() <{level = 10 : i32, message = "bqk,bkd->bqd"}> : () -> ()
    %cst_30 = arith.constant dense<0.000000e+00> : vector<2x8x8xf32>
    %122 = tpu.matmul %120, %121, %cst_30 {dimension_numbers = #tpu.dot_dimension_numbers<[2], [1], [1], [2], [0, 0, 0, 1, 1, 2], [0], [0]>} : vector<2x8x8xbf16>, vector<2x8x8xbf16>, vector<2x8x8xf32> -> vector<2x8x8xf32>
    "tpu.trace_stop"() : () -> ()
    %123 = vector.shape_cast %122 : vector<2x8x8xf32> to vector<16x8xf32>
    %124 = tpu.concatenate %42, %69, %96, %123 in 1 : vector<16x8xf32>, vector<16x8xf32>, vector<16x8xf32>, vector<16x8xf32> -> vector<16x32xf32>
    %125 = arith.truncf %124 : vector<16x32xf32> to vector<16x32xbf16>
    %c0_31 = arith.constant 0 : index
    %c0_32 = arith.constant 0 : index
    %c0_33 = arith.constant 0 : index
    %126 = vector.load %arg7[%c0_31, %c0_32, %c0_33] : memref<1x32x32xbf16, #tpu.memory_space<vmem>>, vector<1x32x32xbf16>
    %127 = vector.shape_cast %126 : vector<1x32x32xbf16> to vector<32x32xbf16>
    %cst_34 = arith.constant dense<0.000000e+00> : vector<16x32xf32>
    %128 = tpu.matmul %125, %127, %cst_34 {dimension_numbers = #tpu.dot_dimension_numbers<[1], [0], [0], [1], [0, 0, 1, 1], [], []>} : vector<16x32xbf16>, vector<32x32xbf16>, vector<16x32xf32> -> vector<16x32xf32>
    %c0_35 = arith.constant 0 : index
    %c0_36 = arith.constant 0 : index
    %c0_37 = arith.constant 0 : index
    %129 = vector.load %arg8[%c0_35, %c0_36, %c0_37] : memref<1x1x32xf32, #tpu.memory_space<vmem>>, vector<1x1x32xf32>
    %130 = vector.shape_cast %129 : vector<1x1x32xf32> to vector<1x32xf32>
    %131 = vector.broadcast %130 : vector<1x32xf32> to vector<16x32xf32>
    %132 = arith.addf %128, %131 : vector<16x32xf32>
    %133 = arith.addf %132, %3 : vector<16x32xf32>
    %c0_38 = arith.constant 0 : index
    %c0_39 = arith.constant 0 : index
    %c0_40 = arith.constant 0 : index
    %134 = vector.load %arg9[%c0_38, %c0_39, %c0_40] : memref<1x1x32xf32, #tpu.memory_space<vmem>>, vector<1x1x32xf32>
    %135 = vector.shape_cast %134 : vector<1x1x32xf32> to vector<1x32xf32>
    %c0_41 = arith.constant 0 : index
    %c0_42 = arith.constant 0 : index
    %c0_43 = arith.constant 0 : index
    %136 = vector.load %arg10[%c0_41, %c0_42, %c0_43] : memref<1x1x32xf32, #tpu.memory_space<vmem>>, vector<1x1x32xf32>
    %137 = vector.shape_cast %136 : vector<1x1x32xf32> to vector<1x32xf32>
    %cst_44 = arith.constant dense<0.000000e+00> : vector<16xf32>
    %138 = vector.multi_reduction <add>, %133, %cst_44 [1] : vector<16x32xf32> to vector<16xf32>
    %139 = vector.shape_cast %138 : vector<16xf32> to vector<16x1xf32>
    %cst_45 = arith.constant 3.200000e+01 : f32
    %140 = vector.broadcast %cst_45 : f32 to vector<16x1xf32>
    %141 = arith.divf %139, %140 : vector<16x1xf32>
    %142 = vector.broadcast %141 : vector<16x1xf32> to vector<16x32xf32>
    %143 = arith.subf %133, %142 : vector<16x32xf32>
    %144 = vector.broadcast %141 : vector<16x1xf32> to vector<16x32xf32>
    %145 = arith.subf %133, %144 : vector<16x32xf32>
    %146 = arith.mulf %143, %145 : vector<16x32xf32>
    %cst_46 = arith.constant dense<0.000000e+00> : vector<16xf32>
    %147 = vector.multi_reduction <add>, %146, %cst_46 [1] : vector<16x32xf32> to vector<16xf32>
    %148 = vector.shape_cast %147 : vector<16xf32> to vector<16x1xf32>
    %cst_47 = arith.constant 3.200000e+01 : f32
    %149 = vector.broadcast %cst_47 : f32 to vector<16x1xf32>
    %150 = arith.divf %148, %149 : vector<16x1xf32>
    %151 = vector.broadcast %141 : vector<16x1xf32> to vector<16x32xf32>
    %152 = arith.subf %133, %151 : vector<16x32xf32>
    %cst_48 = arith.constant 9.99999996E-13 : f32
    %153 = vector.broadcast %cst_48 : f32 to vector<16x1xf32>
    %154 = arith.addf %150, %153 : vector<16x1xf32>
    %155 = math.rsqrt %154 : vector<16x1xf32>
    %156 = vector.broadcast %155 : vector<16x1xf32> to vector<16x32xf32>
    %157 = arith.mulf %152, %156 : vector<16x32xf32>
    %158 = vector.broadcast %135 : vector<1x32xf32> to vector<16x32xf32>
    %159 = arith.mulf %157, %158 : vector<16x32xf32>
    %160 = vector.broadcast %137 : vector<1x32xf32> to vector<16x32xf32>
    %161 = arith.addf %159, %160 : vector<16x32xf32>
    %162 = arith.truncf %161 : vector<16x32xf32> to vector<16x32xbf16>
    %c0_49 = arith.constant 0 : index
    %c0_50 = arith.constant 0 : index
    %c0_51 = arith.constant 0 : index
    %163 = vector.load %arg11[%c0_49, %c0_50, %c0_51] : memref<1x32x64xbf16, #tpu.memory_space<vmem>>, vector<1x32x64xbf16>
    %164 = vector.shape_cast %163 : vector<1x32x64xbf16> to vector<32x64xbf16>
    %cst_52 = arith.constant dense<0.000000e+00> : vector<16x64xf32>
    %165 = tpu.matmul %162, %164, %cst_52 {dimension_numbers = #tpu.dot_dimension_numbers<[1], [0], [0], [1], [0, 0, 1, 1], [], []>} : vector<16x32xbf16>, vector<32x64xbf16>, vector<16x64xf32> -> vector<16x64xf32>
    %c0_53 = arith.constant 0 : index
    %c0_54 = arith.constant 0 : index
    %c0_55 = arith.constant 0 : index
    %166 = vector.load %arg12[%c0_53, %c0_54, %c0_55] : memref<1x1x64xf32, #tpu.memory_space<vmem>>, vector<1x1x64xf32>
    %167 = vector.shape_cast %166 : vector<1x1x64xf32> to vector<1x64xf32>
    %168 = vector.broadcast %167 : vector<1x64xf32> to vector<16x64xf32>
    %169 = arith.addf %165, %168 : vector<16x64xf32>
    %cst_56 = arith.constant 5.000000e-01 : f32
    %170 = vector.broadcast %cst_56 : f32 to vector<16x64xf32>
    %171 = arith.mulf %170, %169 : vector<16x64xf32>
    %cst_57 = arith.constant 4.471500e-02 : f32
    %172 = vector.broadcast %cst_57 : f32 to vector<16x64xf32>
    %173 = arith.mulf %172, %169 : vector<16x64xf32>
    %174 = arith.mulf %173, %169 : vector<16x64xf32>
    %175 = arith.mulf %174, %169 : vector<16x64xf32>
    %176 = arith.addf %169, %175 : vector<16x64xf32>
    %cst_58 = arith.constant 0.797884583 : f32
    %177 = vector.broadcast %cst_58 : f32 to vector<16x64xf32>
    %178 = arith.mulf %177, %176 : vector<16x64xf32>
    %179 = math.tanh %178 : vector<16x64xf32>
    %cst_59 = arith.constant 1.000000e+00 : f32
    %180 = vector.broadcast %cst_59 : f32 to vector<16x64xf32>
    %181 = arith.addf %180, %179 : vector<16x64xf32>
    %182 = arith.mulf %171, %181 : vector<16x64xf32>
    %183 = arith.truncf %182 : vector<16x64xf32> to vector<16x64xbf16>
    %c0_60 = arith.constant 0 : index
    %c0_61 = arith.constant 0 : index
    %c0_62 = arith.constant 0 : index
    %184 = vector.load %arg13[%c0_60, %c0_61, %c0_62] : memref<1x64x32xbf16, #tpu.memory_space<vmem>>, vector<1x64x32xbf16>
    %185 = vector.shape_cast %184 : vector<1x64x32xbf16> to vector<64x32xbf16>
    %cst_63 = arith.constant dense<0.000000e+00> : vector<16x32xf32>
    %186 = tpu.matmul %183, %185, %cst_63 {dimension_numbers = #tpu.dot_dimension_numbers<[1], [0], [0], [1], [0, 0, 1, 1], [], []>} : vector<16x64xbf16>, vector<64x32xbf16>, vector<16x32xf32> -> vector<16x32xf32>
    %c0_64 = arith.constant 0 : index
    %c0_65 = arith.constant 0 : index
    %c0_66 = arith.constant 0 : index
    %187 = vector.load %arg14[%c0_64, %c0_65, %c0_66] : memref<1x1x32xf32, #tpu.memory_space<vmem>>, vector<1x1x32xf32>
    %188 = vector.shape_cast %187 : vector<1x1x32xf32> to vector<1x32xf32>
    %189 = vector.broadcast %188 : vector<1x32xf32> to vector<16x32xf32>
    %190 = arith.addf %186, %189 : vector<16x32xf32>
    %191 = arith.addf %190, %161 : vector<16x32xf32>
    %c0_67 = arith.constant 0 : index
    %c0_68 = arith.constant 0 : index
    %c0_69 = arith.constant 0 : index
    %192 = vector.load %arg15[%c0_67, %c0_68, %c0_69] : memref<1x1x32xf32, #tpu.memory_space<vmem>>, vector<1x1x32xf32>
    %193 = vector.shape_cast %192 : vector<1x1x32xf32> to vector<1x32xf32>
    %c0_70 = arith.constant 0 : index
    %c0_71 = arith.constant 0 : index
    %c0_72 = arith.constant 0 : index
    %194 = vector.load %arg16[%c0_70, %c0_71, %c0_72] : memref<1x1x32xf32, #tpu.memory_space<vmem>>, vector<1x1x32xf32>
    %195 = vector.shape_cast %194 : vector<1x1x32xf32> to vector<1x32xf32>
    %cst_73 = arith.constant dense<0.000000e+00> : vector<16xf32>
    %196 = vector.multi_reduction <add>, %191, %cst_73 [1] : vector<16x32xf32> to vector<16xf32>
    %197 = vector.shape_cast %196 : vector<16xf32> to vector<16x1xf32>
    %cst_74 = arith.constant 3.200000e+01 : f32
    %198 = vector.broadcast %cst_74 : f32 to vector<16x1xf32>
    %199 = arith.divf %197, %198 : vector<16x1xf32>
    %200 = vector.broadcast %199 : vector<16x1xf32> to vector<16x32xf32>
    %201 = arith.subf %191, %200 : vector<16x32xf32>
    %202 = vector.broadcast %199 : vector<16x1xf32> to vector<16x32xf32>
    %203 = arith.subf %191, %202 : vector<16x32xf32>
    %204 = arith.mulf %201, %203 : vector<16x32xf32>
    %cst_75 = arith.constant dense<0.000000e+00> : vector<16xf32>
    %205 = vector.multi_reduction <add>, %204, %cst_75 [1] : vector<16x32xf32> to vector<16xf32>
    %206 = vector.shape_cast %205 : vector<16xf32> to vector<16x1xf32>
    %cst_76 = arith.constant 3.200000e+01 : f32
    %207 = vector.broadcast %cst_76 : f32 to vector<16x1xf32>
    %208 = arith.divf %206, %207 : vector<16x1xf32>
    %209 = vector.broadcast %199 : vector<16x1xf32> to vector<16x32xf32>
    %210 = arith.subf %191, %209 : vector<16x32xf32>
    %cst_77 = arith.constant 9.99999996E-13 : f32
    %211 = vector.broadcast %cst_77 : f32 to vector<16x1xf32>
    %212 = arith.addf %208, %211 : vector<16x1xf32>
    %213 = math.rsqrt %212 : vector<16x1xf32>
    %214 = vector.broadcast %213 : vector<16x1xf32> to vector<16x32xf32>
    %215 = arith.mulf %210, %214 : vector<16x32xf32>
    %216 = vector.broadcast %193 : vector<1x32xf32> to vector<16x32xf32>
    %217 = arith.mulf %215, %216 : vector<16x32xf32>
    %218 = vector.broadcast %195 : vector<1x32xf32> to vector<16x32xf32>
    %219 = arith.addf %217, %218 : vector<16x32xf32>
    %c0_78 = arith.constant 0 : index
    %c0_79 = arith.constant 0 : index
    %220 = vector.load %arg22[%c0_78, %c0_79] : memref<16x32xf32, #tpu.memory_space<vmem>>, vector<16x32xf32>
    tpu.vector_store %arg22[%c0_78, %c0_79], %219 {strides = array<i32>} : memref<16x32xf32, #tpu.memory_space<vmem>>, vector<16x32xf32>,
    %c1_i32 = arith.constant 1 : i32
    %221 = arith.cmpi eq, %arg0, %c1_i32 : i32
    %222 = arith.extui %221 : i1 to i32
    %c0_i32_80 = arith.constant 0 : i32
    %223 = arith.cmpi ne, %222, %c0_i32_80 : i32
    scf.if %223 {
      %224 = vector.extract_strided_slice %219 {offsets = [0, 0], sizes = [1, 32], strides = [1, 1]} : vector<16x32xf32> to vector<1x32xf32>
      %225 = vector.extract_strided_slice %219 {offsets = [8, 0], sizes = [1, 32], strides = [1, 1]} : vector<16x32xf32> to vector<1x32xf32>
      %226 = tpu.concatenate %224, %225 in 0 : vector<1x32xf32>, vector<1x32xf32> -> vector<2x32xf32>
      %227 = arith.truncf %226 : vector<2x32xf32> to vector<2x32xbf16>
      %c0_81 = arith.constant 0 : index
      %c0_82 = arith.constant 0 : index
      %228 = vector.load %arg17[%c0_81, %c0_82] : memref<32x32xbf16, #tpu.memory_space<vmem>>, vector<32x32xbf16>
      %cst_83 = arith.constant dense<0.000000e+00> : vector<2x32xf32>
      %229 = tpu.matmul %227, %228, %cst_83 {dimension_numbers = #tpu.dot_dimension_numbers<[1], [0], [0], [1], [0, 0, 1, 1], [], []>} : vector<2x32xbf16>, vector<32x32xbf16>, vector<2x32xf32> -> vector<2x32xf32>
      %c0_84 = arith.constant 0 : index
      %c0_85 = arith.constant 0 : index
      %230 = vector.load %arg18[%c0_84, %c0_85] : memref<1x32xf32, #tpu.memory_space<vmem>>, vector<1x32xf32>
      %231 = vector.broadcast %230 : vector<1x32xf32> to vector<2x32xf32>
      %232 = arith.addf %229, %231 : vector<2x32xf32>
      %233 = math.tanh %232 : vector<2x32xf32>
      %c0_86 = arith.constant 0 : index
      %c0_87 = arith.constant 0 : index
      %234 = vector.load %arg19[%c0_86, %c0_87] : memref<32x3xf32, #tpu.memory_space<vmem>>, vector<32x3xf32>
      %cst_88 = arith.constant dense<0.000000e+00> : vector<2x3xf32>
      %235 = tpu.matmul %233, %234, %cst_88 {dimension_numbers = #tpu.dot_dimension_numbers<[1], [0], [0], [1], [0, 0, 1, 1], [], []>} : vector<2x32xf32>, vector<32x3xf32>, vector<2x3xf32> -> vector<2x3xf32>
      %c0_89 = arith.constant 0 : index
      %c0_90 = arith.constant 0 : index
      %236 = vector.load %arg20[%c0_89, %c0_90] : memref<1x3xf32, #tpu.memory_space<vmem>>, vector<1x3xf32>
      %237 = vector.broadcast %236 : vector<1x3xf32> to vector<2x3xf32>
      %238 = arith.addf %235, %237 : vector<2x3xf32>
      %c0_91 = arith.constant 0 : index
      %c0_92 = arith.constant 0 : index
      %239 = vector.load %arg21[%c0_91, %c0_92] : memref<2x3xf32, #tpu.memory_space<vmem>>, vector<2x3xf32>
      tpu.vector_store %arg21[%c0_91, %c0_92], %238 {strides = array<i32>} : memref<2x3xf32, #tpu.memory_space<vmem>>, vector<2x3xf32>,
    } else {
    }
    return
  }
  func.func @transform_0(%arg0: i32) -> (i32, i32) {
    %c0_i32 = arith.constant 0 : i32
    %c0_i32_0 = arith.constant 0 : i32
    %c0_i32_1 = arith.constant 0 : i32
    return %c0_i32, %c0_i32_0 : i32, i32
  }
  func.func @transform_1(%arg0: i32) -> (i32, i32, i32) {
    %c0_i32 = arith.constant 0 : i32
    %c0_i32_0 = arith.constant 0 : i32
    %c0_i32_1 = arith.constant 0 : i32
    %c0_i32_2 = arith.constant 0 : i32
    return %c0_i32, %c0_i32_0, %c0_i32_1 : i32, i32, i32
  }
  func.func @transform_2(%arg0: i32) -> (i32, i32) {
    %c0_i32 = arith.constant 0 : i32
    %c0_i32_0 = arith.constant 0 : i32
    %c0_i32_1 = arith.constant 0 : i32
    return %c0_i32, %c0_i32_0 : i32, i32
  }
  func.func @transform_3(%arg0: i32) -> (i32, i32) {
    %c0_i32 = arith.constant 0 : i32
    %c0_i32_0 = arith.constant 0 : i32
    %c0_i32_1 = arith.constant 0 : i32
    return %c0_i32, %c0_i32_0 : i32, i32
  }
  func.func @transform_4(%arg0: i32) -> (i32, i32, i32) {
    %c0_i32 = arith.constant 0 : i32
    %c0_i32_0 = arith.constant 0 : i32
    %c0_i32_1 = arith.constant 0 : i32
    return %arg0, %c0_i32, %c0_i32_0 : i32, i32, i32
  }
  func.func @transform_5(%arg0: i32) -> (i32, i32, i32) {
    %c0_i32 = arith.constant 0 : i32
    %c0_i32_0 = arith.constant 0 : i32
    %c0_i32_1 = arith.constant 0 : i32
    return %arg0, %c0_i32, %c0_i32_0 : i32, i32, i32
  }
  func.func @transform_6(%arg0: i32) -> (i32, i32, i32) {
    %c0_i32 = arith.constant 0 : i32
    %c0_i32_0 = arith.constant 0 : i32
    %c0_i32_1 = arith.constant 0 : i32
    return %arg0, %c0_i32, %c0_i32_0 : i32, i32, i32
  }
  func.func @transform_7(%arg0: i32) -> (i32, i32, i32) {
    %c0_i32 = arith.constant 0 : i32
    %c0_i32_0 = arith.constant 0 : i32
    %c0_i32_1 = arith.constant 0 : i32
    return %arg0, %c0_i32, %c0_i32_0 : i32, i32, i32
  }
  func.func @transform_8(%arg0: i32) -> (i32, i32, i32) {
    %c0_i32 = arith.constant 0 : i32
    %c0_i32_0 = arith.constant 0 : i32
    %c0_i32_1 = arith.constant 0 : i32
    return %arg0, %c0_i32, %c0_i32_0 : i32, i32, i32
  }
  func.func @transform_9(%arg0: i32) -> (i32, i32, i32) {
    %c0_i32 = arith.constant 0 : i32
    %c0_i32_0 = arith.constant 0 : i32
    %c0_i32_1 = arith.constant 0 : i32
    return %arg0, %c0_i32, %c0_i32_0 : i32, i32, i32
  }
  func.func @transform_10(%arg0: i32) -> (i32, i32, i32) {
    %c0_i32 = arith.constant 0 : i32
    %c0_i32_0 = arith.constant 0 : i32
    %c0_i32_1 = arith.constant 0 : i32
    return %arg0, %c0_i32, %c0_i32_0 : i32, i32, i32
  }
  func.func @transform_11(%arg0: i32) -> (i32, i32, i32) {
    %c0_i32 = arith.constant 0 : i32
    %c0_i32_0 = arith.constant 0 : i32
    %c0_i32_1 = arith.constant 0 : i32
    return %arg0, %c0_i32, %c0_i32_0 : i32, i32, i32
  }
  func.func @transform_12(%arg0: i32) -> (i32, i32, i32) {
    %c0_i32 = arith.constant 0 : i32
    %c0_i32_0 = arith.constant 0 : i32
    %c0_i32_1 = arith.constant 0 : i32
    return %arg0, %c0_i32, %c0_i32_0 : i32, i32, i32
  }
  func.func @transform_13(%arg0: i32) -> (i32, i32, i32) {
    %c0_i32 = arith.constant 0 : i32
    %c0_i32_0 = arith.constant 0 : i32
    %c0_i32_1 = arith.constant 0 : i32
    return %arg0, %c0_i32, %c0_i32_0 : i32, i32, i32
  }
  func.func @transform_14(%arg0: i32) -> (i32, i32, i32) {
    %c0_i32 = arith.constant 0 : i32
    %c0_i32_0 = arith.constant 0 : i32
    %c0_i32_1 = arith.constant 0 : i32
    return %arg0, %c0_i32, %c0_i32_0 : i32, i32, i32
  }
  func.func @transform_15(%arg0: i32) -> (i32, i32, i32) {
    %c0_i32 = arith.constant 0 : i32
    %c0_i32_0 = arith.constant 0 : i32
    %c0_i32_1 = arith.constant 0 : i32
    return %arg0, %c0_i32, %c0_i32_0 : i32, i32, i32
  }
  func.func @transform_16(%arg0: i32) -> (i32, i32) {
    %c0_i32 = arith.constant 0 : i32
    %c0_i32_0 = arith.constant 0 : i32
    %c0_i32_1 = arith.constant 0 : i32
    return %c0_i32, %c0_i32_0 : i32, i32
  }
  func.func @transform_17(%arg0: i32) -> (i32, i32) {
    %c0_i32 = arith.constant 0 : i32
    %c0_i32_0 = arith.constant 0 : i32
    %c0_i32_1 = arith.constant 0 : i32
    return %c0_i32, %c0_i32_0 : i32, i32
  }
  func.func @transform_18(%arg0: i32) -> (i32, i32) {
    %c0_i32 = arith.constant 0 : i32
    %c0_i32_0 = arith.constant 0 : i32
    %c0_i32_1 = arith.constant 0 : i32
    return %c0_i32, %c0_i32_0 : i32, i32
  }
  func.func @transform_19(%arg0: i32) -> (i32, i32) {
    %c0_i32 = arith.constant 0 : i32
    %c0_i32_0 = arith.constant 0 : i32
    %c0_i32_1 = arith.constant 0 : i32
    return %c0_i32, %c0_i32_0 : i32, i32
  }
  func.func @transform_20(%arg0: i32) -> (i32, i32) {
    %c0_i32 = arith.constant 0 : i32
    %c0_i32_0 = arith.constant 0 : i32
    %c0_i32_1 = arith.constant 0 : i32
    return %c0_i32, %c0_i32_0 : i32, i32
  }
}

</mosaic_0001>

<llo_original>
// kernel: bert_nli_forward.1
$region0: #{bert_nli_forward.1}
  #allocation0 [shape = 'u32[]', space=smem, size = 0x4, offset = 0x4, fixed_abs, tag = 'smem constant byte address 0x4 - core index']
  #allocation1 [shape = 'u32[144,128]{1,0:T(1,128)}', space=vmem, size = 0x12000, scoped, tag = 'internal scratch']
  #allocation2 [shape = 'f32[16,32]{1,0:T(8,128)}', space=vmem, size = 0x2000, scoped, tag = 'scratch operand']
  %s0 = inlined_call_operand.vmem [shape: f32[16,32], index: 0, kind: input, shape index: {}]
  %s1 = inlined_call_operand.vmem [shape: f32[2,1,8], index: 1, kind: input, shape index: {}]
  %s2 = inlined_call_operand.vmem [shape: f32[1,32], index: 2, kind: input, shape index: {}]
  %s3 = inlined_call_operand.vmem [shape: f32[1,32], index: 3, kind: input, shape index: {}]
  %s4 = inlined_call_operand.vmem [shape: bf16[2,32,96], index: 4, kind: input, shape index: {}]
  %s5 = inlined_call_operand.vmem [shape: f32[2,1,96], index: 5, kind: input, shape index: {}]
  %s6 = inlined_call_operand.vmem [shape: bf16[2,32,32], index: 6, kind: input, shape index: {}]
  %s7 = inlined_call_operand.vmem [shape: f32[2,1,32], index: 7, kind: input, shape index: {}]
  %s8 = inlined_call_operand.vmem [shape: f32[2,1,32], index: 8, kind: input, shape index: {}]
  %s9 = inlined_call_operand.vmem [shape: f32[2,1,32], index: 9, kind: input, shape index: {}]
  %s10 = inlined_call_operand.vmem [shape: bf16[2,32,64], index: 10, kind: input, shape index: {}]
  %s11 = inlined_call_operand.vmem [shape: f32[2,1,64], index: 11, kind: input, shape index: {}]
  %s12 = inlined_call_operand.vmem [shape: bf16[2,64,32], index: 12, kind: input, shape index: {}]
  %s13 = inlined_call_operand.vmem [shape: f32[2,1,32], index: 13, kind: input, shape index: {}]
  %s14 = inlined_call_operand.vmem [shape: f32[2,1,32], index: 14, kind: input, shape index: {}]
  %s15 = inlined_call_operand.vmem [shape: f32[2,1,32], index: 15, kind: input, shape index: {}]
  %s16 = inlined_call_operand.vmem [shape: bf16[32,32], index: 16, kind: input, shape index: {}]
  %s17 = inlined_call_operand.vmem [shape: f32[1,32], index: 17, kind: input, shape index: {}]
  %s18 = inlined_call_operand.vmem [shape: f32[32,3], index: 18, kind: input, shape index: {}]
  %s19 = inlined_call_operand.vmem [shape: f32[1,3], index: 19, kind: input, shape index: {}]
  %s20 = inlined_call_operand.hbm [shape: f32[2,3], index: 20, kind: output, shape index: {}]
  %s21 = sld [smem:[#allocation0]]
  $region121: #{bert_nli_forward.1} parent=0
    _
  %s23 = ssub.s32 1, %s21
  %s24 = scalar_select 0, %s23, %s21
  $region1: #{bert_nli_forward.1} parent=0
    #allocation3 [shape = 'u8[1024]{0}', space=vmem, size = 0x400, scoped, tag = 'output window, operand 0, single buffered']
    #allocation4 [shape = 's32[2]{0}', space=sflag, size = 0x8, scoped, tag = 'scoped memory for bert_nli_forward.1']
    %25 = vsyncpa [#allocation4], 0
    loop: start=0, step=1, limit=4
    $region2: #{bert_nli_forward.1} parent=1 // loop_pre_header
      _
    $region3: #{bert_nli_forward.1} parent=1 // loop_header
      %s27 = sphi 0, %s31
      %p28 = scmp.ge.s32.totalorder %s27, 4
      %s35 = sphi 0, %s35
      %s37 = sphi 0, %s35
      %s38 = sphi 0, %s37
      %s52 = sphi 0, %s38
      %s56 = sphi 0, %s56
      %s58 = sphi 0, %s56
      %s59 = sphi 0, %s58
      %s73 = sphi 0, %s59
      %s77 = sphi 0, %s77
      %s79 = sphi 0, %s77
      %s80 = sphi 0, %s79
      %s94 = sphi 0, %s80
      %s98 = sphi 0, %s98
      %s100 = sphi 0, %s98
      %s101 = sphi 0, %s100
      %s115 = sphi 0, %s101
      %s121 = sphi 0, %s123
      %s124 = sphi 0, %s121
      %s125 = sphi 0, %s124
      %s141 = sphi 0, %s125
      %s147 = sphi 0, %s149
      %s150 = sphi 0, %s147
      %s151 = sphi 0, %s150
      %s167 = sphi 0, %s151
      %s173 = sphi 0, %s175
      %s176 = sphi 0, %s173
      %s177 = sphi 0, %s176
      %s193 = sphi 0, %s177
      %s199 = sphi 0, %s201
      %s202 = sphi 0, %s199
      %s203 = sphi 0, %s202
      %s219 = sphi 0, %s203
      %s225 = sphi 0, %s227
      %s228 = sphi 0, %s225
      %s229 = sphi 0, %s228
      %s245 = sphi 0, %s229
      %s251 = sphi 0, %s253
      %s254 = sphi 0, %s251
      %s255 = sphi 0, %s254
      %s271 = sphi 0, %s255
      %s277 = sphi 0, %s279
      %s280 = sphi 0, %s277
      %s281 = sphi 0, %s280
      %s297 = sphi 0, %s281
      %s303 = sphi 0, %s305
      %s306 = sphi 0, %s303
      %s307 = sphi 0, %s306
      %s323 = sphi 0, %s307
      %s329 = sphi 0, %s331
      %s332 = sphi 0, %s329
      %s333 = sphi 0, %s332
      %s349 = sphi 0, %s333
      %s355 = sphi 0, %s357
      %s358 = sphi 0, %s355
      %s359 = sphi 0, %s358
      %s375 = sphi 0, %s359
      %s381 = sphi 0, %s383
      %s384 = sphi 0, %s381
      %s385 = sphi 0, %s384
      %s401 = sphi 0, %s385
      %s407 = sphi 0, %s409
      %s410 = sphi 0, %s407
      %s411 = sphi 0, %s410
      %s427 = sphi 0, %s411
      %s431 = sphi 0, %s431
      %s433 = sphi 0, %s431
      %s434 = sphi 0, %s433
      %s448 = sphi 0, %s434
      %s452 = sphi 0, %s452
      %s454 = sphi 0, %s452
      %s455 = sphi 0, %s454
      %s469 = sphi 0, %s455
      %s473 = sphi 0, %s473
      %s475 = sphi 0, %s473
      %s476 = sphi 0, %s475
      %s490 = sphi 0, %s476
      %s494 = sphi 0, %s494
      %s496 = sphi 0, %s494
      %s497 = sphi 0, %s496
      %s511 = sphi 0, %s497
      %s515 = sphi 0, %s515
      %s517 = sphi 0, %s515
      %s518 = sphi 0, %s517
      %s532 = sphi 0, %s518
    $region4: #{bert_nli_forward.1} parent=1 // loop_header_branch
      %30 = sbr.rel (%p28) target = $region8
    $region5: #{bert_nli_forward.1} parent=1 // loop_body
      %s32 = ssub.s32 %s27, 1
      %s33 = ssub.s32 %s27, 2
      %s34 = sadd.s32 %s27, 1
      %s36 = sadd.s32 %s35, 1
      %p39 = scmp.eq.s32.totalorder %s27, 1
      %p40 = scmp.ne.s32.totalorder %s35, %s37
      %p41 = scmp.eq.s32.totalorder %s27, 0
      %p42 = por %p40, %p41
      %p43 = scmp.ne.s32.totalorder %s35, %s37
      %p44 = scmp.eq.s32.totalorder %s32, 1
      %p45 = por %p43, %p44
      %p46 = scmp.ne.s32.totalorder %s37, %s38
      %p47 = scmp.eq.s32.totalorder %s32, 0
      %p48 = por %p46, %p47
      %p49 = scmp.ne.s32.totalorder %s37, %s38
      %p50 = scmp.eq.s32.totalorder %s33, 1
      %p51 = por %p49, %p50
      %p53 = scmp.ne.s32.totalorder %s38, %s52
      %p54 = scmp.eq.s32.totalorder %s33, 0
      %p55 = por %p53, %p54
      %s57 = sadd.s32 %s56, 1
      %p60 = scmp.eq.s32.totalorder %s27, 1
      %p61 = scmp.ne.s32.totalorder %s56, %s58
      %p62 = scmp.eq.s32.totalorder %s27, 0
      %p63 = por %p61, %p62
      %p64 = scmp.ne.s32.totalorder %s56, %s58
      %p65 = scmp.eq.s32.totalorder %s32, 1
      %p66 = por %p64, %p65
      %p67 = scmp.ne.s32.totalorder %s58, %s59
      %p68 = scmp.eq.s32.totalorder %s32, 0
      %p69 = por %p67, %p68
      %p70 = scmp.ne.s32.totalorder %s58, %s59
      %p71 = scmp.eq.s32.totalorder %s33, 1
      %p72 = por %p70, %p71
      %p74 = scmp.ne.s32.totalorder %s59, %s73
      %p75 = scmp.eq.s32.totalorder %s33, 0
      %p76 = por %p74, %p75
      %s78 = sadd.s32 %s77, 1
      %p81 = scmp.eq.s32.totalorder %s27, 1
      %p82 = scmp.ne.s32.totalorder %s77, %s79
      %p83 = scmp.eq.s32.totalorder %s27, 0
      %p84 = por %p82, %p83
      %p85 = scmp.ne.s32.totalorder %s77, %s79
      %p86 = scmp.eq.s32.totalorder %s32, 1
      %p87 = por %p85, %p86
      %p88 = scmp.ne.s32.totalorder %s79, %s80
      %p89 = scmp.eq.s32.totalorder %s32, 0
      %p90 = por %p88, %p89
      %p91 = scmp.ne.s32.totalorder %s79, %s80
      %p92 = scmp.eq.s32.totalorder %s33, 1
      %p93 = por %p91, %p92
      %p95 = scmp.ne.s32.totalorder %s80, %s94
      %p96 = scmp.eq.s32.totalorder %s33, 0
      %p97 = por %p95, %p96
      %s99 = sadd.s32 %s98, 1
      %p102 = scmp.eq.s32.totalorder %s27, 1
      %p103 = scmp.ne.s32.totalorder %s98, %s100
      %p104 = scmp.eq.s32.totalorder %s27, 0
      %p105 = por %p103, %p104
      %p106 = scmp.ne.s32.totalorder %s98, %s100
      %p107 = scmp.eq.s32.totalorder %s32, 1
      %p108 = por %p106, %p107
      %p109 = scmp.ne.s32.totalorder %s100, %s101
      %p110 = scmp.eq.s32.totalorder %s32, 0
      %p111 = por %p109, %p110
      %p112 = scmp.ne.s32.totalorder %s100, %s101
      %p113 = scmp.eq.s32.totalorder %s33, 1
      %p114 = por %p112, %p113
      %p116 = scmp.ne.s32.totalorder %s101, %s115
      %p117 = scmp.eq.s32.totalorder %s33, 0
      %p118 = por %p116, %p117
      %s119 = ssub.s32 %s27, %s34
      %p120 = scmp.eq.s32.totalorder %s119, 0
      %s122 = sadd.s32 %s121, 1
      %s123 = scalar_select %p120, %s121, %s122
      %p126 = pneg %p120
      %p127 = scmp.eq.s32.totalorder %s27, 1
      %p128 = por %p126, %p127
      %p129 = scmp.ne.s32.totalorder %s121, %s124
      %p130 = scmp.eq.s32.totalorder %s27, 0
      %p131 = por %p129, %p130
      %p132 = scmp.ne.s32.totalorder %s121, %s124
      %p133 = scmp.eq.s32.totalorder %s32, 1
      %p134 = por %p132, %p133
      %p135 = scmp.ne.s32.totalorder %s124, %s125
      %p136 = scmp.eq.s32.totalorder %s32, 0
      %p137 = por %p135, %p136
      %p138 = scmp.ne.s32.totalorder %s124, %s125
      %p139 = scmp.eq.s32.totalorder %s33, 1
      %p140 = por %p138, %p139
      %p142 = scmp.ne.s32.totalorder %s125, %s141
      %p143 = scmp.eq.s32.totalorder %s33, 0
      %p144 = por %p142, %p143
      %s145 = ssub.s32 %s27, %s34
      %p146 = scmp.eq.s32.totalorder %s145, 0
      %s148 = sadd.s32 %s147, 1
      %s149 = scalar_select %p146, %s147, %s148
      %p152 = pneg %p146
      %p153 = scmp.eq.s32.totalorder %s27, 1
      %p154 = por %p152, %p153
      %p155 = scmp.ne.s32.totalorder %s147, %s150
      %p156 = scmp.eq.s32.totalorder %s27, 0
      %p157 = por %p155, %p156
      %p158 = scmp.ne.s32.totalorder %s147, %s150
      %p159 = scmp.eq.s32.totalorder %s32, 1
      %p160 = por %p158, %p159
      %p161 = scmp.ne.s32.totalorder %s150, %s151
      %p162 = scmp.eq.s32.totalorder %s32, 0
      %p163 = por %p161, %p162
      %p164 = scmp.ne.s32.totalorder %s150, %s151
      %p165 = scmp.eq.s32.totalorder %s33, 1
      %p166 = por %p164, %p165
      %p168 = scmp.ne.s32.totalorder %s151, %s167
      %p169 = scmp.eq.s32.totalorder %s33, 0
      %p170 = por %p168, %p169
      %s171 = ssub.s32 %s27, %s34
      %p172 = scmp.eq.s32.totalorder %s171, 0
      %s174 = sadd.s32 %s173, 1
      %s175 = scalar_select %p172, %s173, %s174
      %p178 = pneg %p172
      %p179 = scmp.eq.s32.totalorder %s27, 1
      %p180 = por %p178, %p179
      %p181 = scmp.ne.s32.totalorder %s173, %s176
      %p182 = scmp.eq.s32.totalorder %s27, 0
      %p183 = por %p181, %p182
      %p184 = scmp.ne.s32.totalorder %s173, %s176
      %p185 = scmp.eq.s32.totalorder %s32, 1
      %p186 = por %p184, %p185
      %p187 = scmp.ne.s32.totalorder %s176, %s177
      %p188 = scmp.eq.s32.totalorder %s32, 0
      %p189 = por %p187, %p188
      %p190 = scmp.ne.s32.totalorder %s176, %s177
      %p191 = scmp.eq.s32.totalorder %s33, 1
      %p192 = por %p190, %p191
      %p194 = scmp.ne.s32.totalorder %s177, %s193
      %p195 = scmp.eq.s32.totalorder %s33, 0
      %p196 = por %p194, %p195
      %s197 = ssub.s32 %s27, %s34
      %p198 = scmp.eq.s32.totalorder %s197, 0
      %s200 = sadd.s32 %s199, 1
      %s201 = scalar_select %p198, %s199, %s200
      %p204 = pneg %p198
      %p205 = scmp.eq.s32.totalorder %s27, 1
      %p206 = por %p204, %p205
      %p207 = scmp.ne.s32.totalorder %s199, %s202
      %p208 = scmp.eq.s32.totalorder %s27, 0
      %p209 = por %p207, %p208
      %p210 = scmp.ne.s32.totalorder %s199, %s202
      %p211 = scmp.eq.s32.totalorder %s32, 1
      %p212 = por %p210, %p211
      %p213 = scmp.ne.s32.totalorder %s202, %s203
      %p214 = scmp.eq.s32.totalorder %s32, 0
      %p215 = por %p213, %p214
      %p216 = scmp.ne.s32.totalorder %s202, %s203
      %p217 = scmp.eq.s32.totalorder %s33, 1
      %p218 = por %p216, %p217
      %p220 = scmp.ne.s32.totalorder %s203, %s219
      %p221 = scmp.eq.s32.totalorder %s33, 0
      %p222 = por %p220, %p221
      %s223 = ssub.s32 %s27, %s34
      %p224 = scmp.eq.s32.totalorder %s223, 0
      %s226 = sadd.s32 %s225, 1
      %s227 = scalar_select %p224, %s225, %s226
      %p230 = pneg %p224
      %p231 = scmp.eq.s32.totalorder %s27, 1
      %p232 = por %p230, %p231
      %p233 = scmp.ne.s32.totalorder %s225, %s228
      %p234 = scmp.eq.s32.totalorder %s27, 0
      %p235 = por %p233, %p234
      %p236 = scmp.ne.s32.totalorder %s225, %s228
      %p237 = scmp.eq.s32.totalorder %s32, 1
      %p238 = por %p236, %p237
      %p239 = scmp.ne.s32.totalorder %s228, %s229
      %p240 = scmp.eq.s32.totalorder %s32, 0
      %p241 = por %p239, %p240
      %p242 = scmp.ne.s32.totalorder %s228, %s229
      %p243 = scmp.eq.s32.totalorder %s33, 1
      %p244 = por %p242, %p243
      %p246 = scmp.ne.s32.totalorder %s229, %s245
      %p247 = scmp.eq.s32.totalorder %s33, 0
      %p248 = por %p246, %p247
      %s249 = ssub.s32 %s27, %s34
      %p250 = scmp.eq.s32.totalorder %s249, 0
      %s252 = sadd.s32 %s251, 1
      %s253 = scalar_select %p250, %s251, %s252
      %p256 = pneg %p250
      %p257 = scmp.eq.s32.totalorder %s27, 1
      %p258 = por %p256, %p257
      %p259 = scmp.ne.s32.totalorder %s251, %s254
      %p260 = scmp.eq.s32.totalorder %s27, 0
      %p261 = por %p259, %p260
      %p262 = scmp.ne.s32.totalorder %s251, %s254
      %p263 = scmp.eq.s32.totalorder %s32, 1
      %p264 = por %p262, %p263
      %p265 = scmp.ne.s32.totalorder %s254, %s255
      %p266 = scmp.eq.s32.totalorder %s32, 0
      %p267 = por %p265, %p266
      %p268 = scmp.ne.s32.totalorder %s254, %s255
      %p269 = scmp.eq.s32.totalorder %s33, 1
      %p270 = por %p268, %p269
      %p272 = scmp.ne.s32.totalorder %s255, %s271
      %p273 = scmp.eq.s32.totalorder %s33, 0
      %p274 = por %p272, %p273
      %s275 = ssub.s32 %s27, %s34
      %p276 = scmp.eq.s32.totalorder %s275, 0
      %s278 = sadd.s32 %s277, 1
      %s279 = scalar_select %p276, %s277, %s278
      %p282 = pneg %p276
      %p283 = scmp.eq.s32.totalorder %s27, 1
      %p284 = por %p282, %p283
      %p285 = scmp.ne.s32.totalorder %s277, %s280
      %p286 = scmp.eq.s32.totalorder %s27, 0
      %p287 = por %p285, %p286
      %p288 = scmp.ne.s32.totalorder %s277, %s280
      %p289 = scmp.eq.s32.totalorder %s32, 1
      %p290 = por %p288, %p289
      %p291 = scmp.ne.s32.totalorder %s280, %s281
      %p292 = scmp.eq.s32.totalorder %s32, 0
      %p293 = por %p291, %p292
      %p294 = scmp.ne.s32.totalorder %s280, %s281
      %p295 = scmp.eq.s32.totalorder %s33, 1
      %p296 = por %p294, %p295
      %p298 = scmp.ne.s32.totalorder %s281, %s297
      %p299 = scmp.eq.s32.totalorder %s33, 0
      %p300 = por %p298, %p299
      %s301 = ssub.s32 %s27, %s34
      %p302 = scmp.eq.s32.totalorder %s301, 0
      %s304 = sadd.s32 %s303, 1
      %s305 = scalar_select %p302, %s303, %s304
      %p308 = pneg %p302
      %p309 = scmp.eq.s32.totalorder %s27, 1
      %p310 = por %p308, %p309
      %p311 = scmp.ne.s32.totalorder %s303, %s306
      %p312 = scmp.eq.s32.totalorder %s27, 0
      %p313 = por %p311, %p312
      %p314 = scmp.ne.s32.totalorder %s303, %s306
      %p315 = scmp.eq.s32.totalorder %s32, 1
      %p316 = por %p314, %p315
      %p317 = scmp.ne.s32.totalorder %s306, %s307
      %p318 = scmp.eq.s32.totalorder %s32, 0
      %p319 = por %p317, %p318
      %p320 = scmp.ne.s32.totalorder %s306, %s307
      %p321 = scmp.eq.s32.totalorder %s33, 1
      %p322 = por %p320, %p321
      %p324 = scmp.ne.s32.totalorder %s307, %s323
      %p325 = scmp.eq.s32.totalorder %s33, 0
      %p326 = por %p324, %p325
      %s327 = ssub.s32 %s27, %s34
      %p328 = scmp.eq.s32.totalorder %s327, 0
      %s330 = sadd.s32 %s329, 1
      %s331 = scalar_select %p328, %s329, %s330
      %p334 = pneg %p328
      %p335 = scmp.eq.s32.totalorder %s27, 1
      %p336 = por %p334, %p335
      %p337 = scmp.ne.s32.totalorder %s329, %s332
      %p338 = scmp.eq.s32.totalorder %s27, 0
      %p339 = por %p337, %p338
      %p340 = scmp.ne.s32.totalorder %s329, %s332
      %p341 = scmp.eq.s32.totalorder %s32, 1
      %p342 = por %p340, %p341
      %p343 = scmp.ne.s32.totalorder %s332, %s333
      %p344 = scmp.eq.s32.totalorder %s32, 0
      %p345 = por %p343, %p344
      %p346 = scmp.ne.s32.totalorder %s332, %s333
      %p347 = scmp.eq.s32.totalorder %s33, 1
      %p348 = por %p346, %p347
      %p350 = scmp.ne.s32.totalorder %s333, %s349
      %p351 = scmp.eq.s32.totalorder %s33, 0
      %p352 = por %p350, %p351
      %s353 = ssub.s32 %s27, %s34
      %p354 = scmp.eq.s32.totalorder %s353, 0
      %s356 = sadd.s32 %s355, 1
      %s357 = scalar_select %p354, %s355, %s356
      %p360 = pneg %p354
      %p361 = scmp.eq.s32.totalorder %s27, 1
      %p362 = por %p360, %p361
      %p363 = scmp.ne.s32.totalorder %s355, %s358
      %p364 = scmp.eq.s32.totalorder %s27, 0
      %p365 = por %p363, %p364
      %p366 = scmp.ne.s32.totalorder %s355, %s358
      %p367 = scmp.eq.s32.totalorder %s32, 1
      %p368 = por %p366, %p367
      %p369 = scmp.ne.s32.totalorder %s358, %s359
      %p370 = scmp.eq.s32.totalorder %s32, 0
      %p371 = por %p369, %p370
      %p372 = scmp.ne.s32.totalorder %s358, %s359
      %p373 = scmp.eq.s32.totalorder %s33, 1
      %p374 = por %p372, %p373
      %p376 = scmp.ne.s32.totalorder %s359, %s375
      %p377 = scmp.eq.s32.totalorder %s33, 0
      %p378 = por %p376, %p377
      %s379 = ssub.s32 %s27, %s34
      %p380 = scmp.eq.s32.totalorder %s379, 0
      %s382 = sadd.s32 %s381, 1
      %s383 = scalar_select %p380, %s381, %s382
      %p386 = pneg %p380
      %p387 = scmp.eq.s32.totalorder %s27, 1
      %p388 = por %p386, %p387
      %p389 = scmp.ne.s32.totalorder %s381, %s384
      %p390 = scmp.eq.s32.totalorder %s27, 0
      %p391 = por %p389, %p390
      %p392 = scmp.ne.s32.totalorder %s381, %s384
      %p393 = scmp.eq.s32.totalorder %s32, 1
      %p394 = por %p392, %p393
      %p395 = scmp.ne.s32.totalorder %s384, %s385
      %p396 = scmp.eq.s32.totalorder %s32, 0
      %p397 = por %p395, %p396
      %p398 = scmp.ne.s32.totalorder %s384, %s385
      %p399 = scmp.eq.s32.totalorder %s33, 1
      %p400 = por %p398, %p399
      %p402 = scmp.ne.s32.totalorder %s385, %s401
      %p403 = scmp.eq.s32.totalorder %s33, 0
      %p404 = por %p402, %p403
      %s405 = ssub.s32 %s27, %s34
      %p406 = scmp.eq.s32.totalorder %s405, 0
      %s408 = sadd.s32 %s407, 1
      %s409 = scalar_select %p406, %s407, %s408
      %p412 = pneg %p406
      %p413 = scmp.eq.s32.totalorder %s27, 1
      %p414 = por %p412, %p413
      %p415 = scmp.ne.s32.totalorder %s407, %s410
      %p416 = scmp.eq.s32.totalorder %s27, 0
      %p417 = por %p415, %p416
      %p418 = scmp.ne.s32.totalorder %s407, %s410
      %p419 = scmp.eq.s32.totalorder %s32, 1
      %p420 = por %p418, %p419
      %p421 = scmp.ne.s32.totalorder %s410, %s411
      %p422 = scmp.eq.s32.totalorder %s32, 0
      %p423 = por %p421, %p422
      %p424 = scmp.ne.s32.totalorder %s410, %s411
      %p425 = scmp.eq.s32.totalorder %s33, 1
      %p426 = por %p424, %p425
      %p428 = scmp.ne.s32.totalorder %s411, %s427
      %p429 = scmp.eq.s32.totalorder %s33, 0
      %p430 = por %p428, %p429
      %s432 = sadd.s32 %s431, 1
      %p435 = scmp.eq.s32.totalorder %s27, 1
      %p436 = scmp.ne.s32.totalorder %s431, %s433
      %p437 = scmp.eq.s32.totalorder %s27, 0
      %p438 = por %p436, %p437
      %p439 = scmp.ne.s32.totalorder %s431, %s433
      %p440 = scmp.eq.s32.totalorder %s32, 1
      %p441 = por %p439, %p440
      %p442 = scmp.ne.s32.totalorder %s433, %s434
      %p443 = scmp.eq.s32.totalorder %s32, 0
      %p444 = por %p442, %p443
      %p445 = scmp.ne.s32.totalorder %s433, %s434
      %p446 = scmp.eq.s32.totalorder %s33, 1
      %p447 = por %p445, %p446
      %p449 = scmp.ne.s32.totalorder %s434, %s448
      %p450 = scmp.eq.s32.totalorder %s33, 0
      %p451 = por %p449, %p450
      %s453 = sadd.s32 %s452, 1
      %p456 = scmp.eq.s32.totalorder %s27, 1
      %p457 = scmp.ne.s32.totalorder %s452, %s454
      %p458 = scmp.eq.s32.totalorder %s27, 0
      %p459 = por %p457, %p458
      %p460 = scmp.ne.s32.totalorder %s452, %s454
      %p461 = scmp.eq.s32.totalorder %s32, 1
      %p462 = por %p460, %p461
      %p463 = scmp.ne.s32.totalorder %s454, %s455
      %p464 = scmp.eq.s32.totalorder %s32, 0
      %p465 = por %p463, %p464
      %p466 = scmp.ne.s32.totalorder %s454, %s455
      %p467 = scmp.eq.s32.totalorder %s33, 1
      %p468 = por %p466, %p467
      %p470 = scmp.ne.s32.totalorder %s455, %s469
      %p471 = scmp.eq.s32.totalorder %s33, 0
      %p472 = por %p470, %p471
      %s474 = sadd.s32 %s473, 1
      %p477 = scmp.eq.s32.totalorder %s27, 1
      %p478 = scmp.ne.s32.totalorder %s473, %s475
      %p479 = scmp.eq.s32.totalorder %s27, 0
      %p480 = por %p478, %p479
      %p481 = scmp.ne.s32.totalorder %s473, %s475
      %p482 = scmp.eq.s32.totalorder %s32, 1
      %p483 = por %p481, %p482
      %p484 = scmp.ne.s32.totalorder %s475, %s476
      %p485 = scmp.eq.s32.totalorder %s32, 0
      %p486 = por %p484, %p485
      %p487 = scmp.ne.s32.totalorder %s475, %s476
      %p488 = scmp.eq.s32.totalorder %s33, 1
      %p489 = por %p487, %p488
      %p491 = scmp.ne.s32.totalorder %s476, %s490
      %p492 = scmp.eq.s32.totalorder %s33, 0
      %p493 = por %p491, %p492
      %s495 = sadd.s32 %s494, 1
      %p498 = scmp.eq.s32.totalorder %s27, 1
      %p499 = scmp.ne.s32.totalorder %s494, %s496
      %p500 = scmp.eq.s32.totalorder %s27, 0
      %p501 = por %p499, %p500
      %p502 = scmp.ne.s32.totalorder %s494, %s496
      %p503 = scmp.eq.s32.totalorder %s32, 1
      %p504 = por %p502, %p503
      %p505 = scmp.ne.s32.totalorder %s496, %s497
      %p506 = scmp.eq.s32.totalorder %s32, 0
      %p507 = por %p505, %p506
      %p508 = scmp.ne.s32.totalorder %s496, %s497
      %p509 = scmp.eq.s32.totalorder %s33, 1
      %p510 = por %p508, %p509
      %p512 = scmp.ne.s32.totalorder %s497, %s511
      %p513 = scmp.eq.s32.totalorder %s33, 0
      %p514 = por %p512, %p513
      %s516 = sadd.s32 %s515, 1
      %p519 = scmp.eq.s32.totalorder %s27, 1
      %p520 = scmp.ne.s32.totalorder %s515, %s517
      %p521 = scmp.eq.s32.totalorder %s27, 0
      %p522 = por %p520, %p521
      %p523 = scmp.ne.s32.totalorder %s515, %s517
      %p524 = scmp.eq.s32.totalorder %s32, 1
      %p525 = por %p523, %p524
      %p526 = scmp.ne.s32.totalorder %s517, %s518
      %p527 = scmp.eq.s32.totalorder %s32, 0
      %p528 = por %p526, %p527
      %p529 = scmp.ne.s32.totalorder %s517, %s518
      %p530 = scmp.eq.s32.totalorder %s33, 1
      %p531 = por %p529, %p530
      %p533 = scmp.ne.s32.totalorder %s518, %s532
      %p534 = scmp.eq.s32.totalorder %s33, 0
      %p535 = por %p533, %p534
      %p536 = scmp.le.s32.totalorder 1, %s27
      %p537 = scmp.lt.s32.totalorder %s27, 3
      %p538 = pnand %p536, %p537
      %p539 = pneg %p538
      // Predicated region
      $region9: #{bert_nli_forward.1} parent=5 // pred_check
        _
      $region10: #{bert_nli_forward.1} parent=5 // pred_check_branch
        %541 = sbr.rel (%p538) target = $region12
      $region11: #{bert_nli_forward.1} parent=5 // pred_region
        %s542 = ssub.s32 %s27, 1
        // Predicated region
        $region13: #{bert_nli_forward.1} parent=11 // pred_check
          %p543 = pneg %p48
        $region14: #{bert_nli_forward.1} parent=11 // pred_check_branch
          %545 = sbr.rel (%p543) target = $region16
        $region15: #{bert_nli_forward.1} parent=11 // pred_region
          _
        $region16: #{bert_nli_forward.1} parent=11 // pred_fallthru
          _
        // Predicated region
        $region17: #{bert_nli_forward.1} parent=11 // pred_check
          %p546 = pneg %p69
        $region18: #{bert_nli_forward.1} parent=11 // pred_check_branch
          %548 = sbr.rel (%p546) target = $region20
        $region19: #{bert_nli_forward.1} parent=11 // pred_region
          _
        $region20: #{bert_nli_forward.1} parent=11 // pred_fallthru
          _
        // Predicated region
        $region21: #{bert_nli_forward.1} parent=11 // pred_check
          %p549 = pneg %p90
        $region22: #{bert_nli_forward.1} parent=11 // pred_check_branch
          %551 = sbr.rel (%p549) target = $region24
        $region23: #{bert_nli_forward.1} parent=11 // pred_region
          _
        $region24: #{bert_nli_forward.1} parent=11 // pred_fallthru
          _
        // Predicated region
        $region25: #{bert_nli_forward.1} parent=11 // pred_check
          %p552 = pneg %p111
        $region26: #{bert_nli_forward.1} parent=11 // pred_check_branch
          %554 = sbr.rel (%p552) target = $region28
        $region27: #{bert_nli_forward.1} parent=11 // pred_region
          _
        $region28: #{bert_nli_forward.1} parent=11 // pred_fallthru
          _
        // Predicated region
        $region29: #{bert_nli_forward.1} parent=11 // pred_check
          %p555 = pneg %p444
        $region30: #{bert_nli_forward.1} parent=11 // pred_check_branch
          %557 = sbr.rel (%p555) target = $region32
        $region31: #{bert_nli_forward.1} parent=11 // pred_region
          _
        $region32: #{bert_nli_forward.1} parent=11 // pred_fallthru
          _
        // Predicated region
        $region33: #{bert_nli_forward.1} parent=11 // pred_check
          %p558 = pneg %p465
        $region34: #{bert_nli_forward.1} parent=11 // pred_check_branch
          %560 = sbr.rel (%p558) target = $region36
        $region35: #{bert_nli_forward.1} parent=11 // pred_region
          _
        $region36: #{bert_nli_forward.1} parent=11 // pred_fallthru
          _
        // Predicated region
        $region37: #{bert_nli_forward.1} parent=11 // pred_check
          %p561 = pneg %p486
        $region38: #{bert_nli_forward.1} parent=11 // pred_check_branch
          %563 = sbr.rel (%p561) target = $region40
        $region39: #{bert_nli_forward.1} parent=11 // pred_region
          _
        $region40: #{bert_nli_forward.1} parent=11 // pred_fallthru
          _
        // Predicated region
        $region41: #{bert_nli_forward.1} parent=11 // pred_check
          %p564 = pneg %p507
        $region42: #{bert_nli_forward.1} parent=11 // pred_check_branch
          %566 = sbr.rel (%p564) target = $region44
        $region43: #{bert_nli_forward.1} parent=11 // pred_region
          _
        $region44: #{bert_nli_forward.1} parent=11 // pred_fallthru
          _
      $region12: #{bert_nli_forward.1} parent=5 // pred_fallthru
        _
      %p567 = scmp.lt.s32.totalorder %s27, 2
      // Predicated region
      $region45: #{bert_nli_forward.1} parent=5 // pred_check
        %p568 = pneg %p567
      $region46: #{bert_nli_forward.1} parent=5 // pred_check_branch
        %570 = sbr.rel (%p568) target = $region48
      $region47: #{bert_nli_forward.1} parent=5 // pred_region
        // Predicated region
        $region49: #{bert_nli_forward.1} parent=47 // pred_check
          %p571 = pneg %p131
        $region50: #{bert_nli_forward.1} parent=47 // pred_check_branch
          %573 = sbr.rel (%p571) target = $region52
        $region51: #{bert_nli_forward.1} parent=47 // pred_region
          %p574 = scmp.lt.s32.totalorder %s27, 1
          %s575 = scalar_select %p574, %s27, 1
          %s576 = smul.addr %s575, 4
          %s577 = smul.addr %s576, 4
          %s578 = scalar_lea.vmem %s4, %s577
        $region52: #{bert_nli_forward.1} parent=47 // pred_fallthru
          _
        // Predicated region
        $region53: #{bert_nli_forward.1} parent=47 // pred_check
          %p579 = pneg %p157
        $region54: #{bert_nli_forward.1} parent=47 // pred_check_branch
          %581 = sbr.rel (%p579) target = $region56
        $region55: #{bert_nli_forward.1} parent=47 // pred_region
          %p582 = scmp.lt.s32.totalorder %s27, 1
          %s583 = scalar_select %p582, %s27, 1
          %s584 = scalar_lea.vmem %s5, %s583
        $region56: #{bert_nli_forward.1} parent=47 // pred_fallthru
          _
        // Predicated region
        $region57: #{bert_nli_forward.1} parent=47 // pred_check
          %p585 = pneg %p183
        $region58: #{bert_nli_forward.1} parent=47 // pred_check_branch
          %587 = sbr.rel (%p585) target = $region60
        $region59: #{bert_nli_forward.1} parent=47 // pred_region
          %p588 = scmp.lt.s32.totalorder %s27, 1
          %s589 = scalar_select %p588, %s27, 1
          %s590 = smul.addr %s589, 4
          %s591 = smul.addr %s590, 4
          %s592 = scalar_lea.vmem %s6, %s591
        $region60: #{bert_nli_forward.1} parent=47 // pred_fallthru
          _
        // Predicated region
        $region61: #{bert_nli_forward.1} parent=47 // pred_check
          %p593 = pneg %p209
        $region62: #{bert_nli_forward.1} parent=47 // pred_check_branch
          %595 = sbr.rel (%p593) target = $region64
        $region63: #{bert_nli_forward.1} parent=47 // pred_region
          %p596 = scmp.lt.s32.totalorder %s27, 1
          %s597 = scalar_select %p596, %s27, 1
          %s598 = scalar_lea.vmem %s7, %s597
        $region64: #{bert_nli_forward.1} parent=47 // pred_fallthru
          _
        // Predicated region
        $region65: #{bert_nli_forward.1} parent=47 // pred_check
          %p599 = pneg %p235
        $region66: #{bert_nli_forward.1} parent=47 // pred_check_branch
          %601 = sbr.rel (%p599) target = $region68
        $region67: #{bert_nli_forward.1} parent=47 // pred_region
          %p602 = scmp.lt.s32.totalorder %s27, 1
          %s603 = scalar_select %p602, %s27, 1
          %s604 = scalar_lea.vmem %s8, %s603
        $region68: #{bert_nli_forward.1} parent=47 // pred_fallthru
          _
        // Predicated region
        $region69: #{bert_nli_forward.1} parent=47 // pred_check
          %p605 = pneg %p261
        $region70: #{bert_nli_forward.1} parent=47 // pred_check_branch
          %607 = sbr.rel (%p605) target = $region72
        $region71: #{bert_nli_forward.1} parent=47 // pred_region
          %p608 = scmp.lt.s32.totalorder %s27, 1
          %s609 = scalar_select %p608, %s27, 1
          %s610 = scalar_lea.vmem %s9, %s609
        $region72: #{bert_nli_forward.1} parent=47 // pred_fallthru
          _
        // Predicated region
        $region73: #{bert_nli_forward.1} parent=47 // pred_check
          %p611 = pneg %p287
        $region74: #{bert_nli_forward.1} parent=47 // pred_check_branch
          %613 = sbr.rel (%p611) target = $region76
        $region75: #{bert_nli_forward.1} parent=47 // pred_region
          %p614 = scmp.lt.s32.totalorder %s27, 1
          %s615 = scalar_select %p614, %s27, 1
          %s616 = smul.addr %s615, 4
          %s617 = smul.addr %s616, 4
          %s618 = scalar_lea.vmem %s10, %s617
        $region76: #{bert_nli_forward.1} parent=47 // pred_fallthru
          _
        // Predicated region
        $region77: #{bert_nli_forward.1} parent=47 // pred_check
          %p619 = pneg %p313
        $region78: #{bert_nli_forward.1} parent=47 // pred_check_branch
          %621 = sbr.rel (%p619) target = $region80
        $region79: #{bert_nli_forward.1} parent=47 // pred_region
          %p622 = scmp.lt.s32.totalorder %s27, 1
          %s623 = scalar_select %p622, %s27, 1
          %s624 = scalar_lea.vmem %s11, %s623
        $region80: #{bert_nli_forward.1} parent=47 // pred_fallthru
          _
        // Predicated region
        $region81: #{bert_nli_forward.1} parent=47 // pred_check
          %p625 = pneg %p339
        $region82: #{bert_nli_forward.1} parent=47 // pred_check_branch
          %627 = sbr.rel (%p625) target = $region84
        $region83: #{bert_nli_forward.1} parent=47 // pred_region
          %p628 = scmp.lt.s32.totalorder %s27, 1
          %s629 = scalar_select %p628, %s27, 1
          %s630 = smul.addr %s629, 8
          %s631 = smul.addr %s630, 4
          %s632 = scalar_lea.vmem %s12, %s631
        $region84: #{bert_nli_forward.1} parent=47 // pred_fallthru
          _
        // Predicated region
        $region85: #{bert_nli_forward.1} parent=47 // pred_check
          %p633 = pneg %p365
        $region86: #{bert_nli_forward.1} parent=47 // pred_check_branch
          %635 = sbr.rel (%p633) target = $region88
        $region87: #{bert_nli_forward.1} parent=47 // pred_region
          %p636 = scmp.lt.s32.totalorder %s27, 1
          %s637 = scalar_select %p636, %s27, 1
          %s638 = scalar_lea.vmem %s13, %s637
        $region88: #{bert_nli_forward.1} parent=47 // pred_fallthru
          _
        // Predicated region
        $region89: #{bert_nli_forward.1} parent=47 // pred_check
          %p639 = pneg %p391
        $region90: #{bert_nli_forward.1} parent=47 // pred_check_branch
          %641 = sbr.rel (%p639) target = $region92
        $region91: #{bert_nli_forward.1} parent=47 // pred_region
          %p642 = scmp.lt.s32.totalorder %s27, 1
          %s643 = scalar_select %p642, %s27, 1
          %s644 = scalar_lea.vmem %s14, %s643
        $region92: #{bert_nli_forward.1} parent=47 // pred_fallthru
          _
        // Predicated region
        $region93: #{bert_nli_forward.1} parent=47 // pred_check
          %p645 = pneg %p417
        $region94: #{bert_nli_forward.1} parent=47 // pred_check_branch
          %647 = sbr.rel (%p645) target = $region96
        $region95: #{bert_nli_forward.1} parent=47 // pred_region
          %p648 = scmp.lt.s32.totalorder %s27, 1
          %s649 = scalar_select %p648, %s27, 1
          %s650 = scalar_lea.vmem %s15, %s649
        $region96: #{bert_nli_forward.1} parent=47 // pred_fallthru
          _
      $region48: #{bert_nli_forward.1} parent=5 // pred_fallthru
        _
      %p651 = scmp.le.s32.totalorder 1, %s27
      %p652 = scmp.lt.s32.totalorder %s27, 3
      %p653 = pnand %p651, %p652
      %p654 = pneg %p653
      // Predicated region
      $region97: #{bert_nli_forward.1} parent=5 // pred_check
        _
      $region98: #{bert_nli_forward.1} parent=5 // pred_check_branch
        %656 = sbr.rel (%p653) target = $region100
      $region99: #{bert_nli_forward.1} parent=5 // pred_region
        %s657 = ssub.s32 %s27, 1
        %p658 = pneg %p48
        %p659 = pneg %p45
        %p660 = pneg %p69
        %p661 = pneg %p66
        %p662 = pneg %p90
        %p663 = pneg %p87
        %p664 = pneg %p111
        %p665 = pneg %p108
        %p666 = scmp.lt.s32.totalorder %s32, 1
        %s667 = scalar_select %p666, %s32, 1
        %s668 = smul.addr %s667, 4
        %s669 = smul.addr %s668, 4
        %s670 = scalar_lea.vmem %s4, %s669
        %p671 = pneg %p137
        %p672 = pneg %p134
        %p673 = scmp.lt.s32.totalorder %s32, 1
        %s674 = scalar_select %p673, %s32, 1
        %s675 = scalar_lea.vmem %s5, %s674
        %p676 = pneg %p163
        %p677 = pneg %p160
        %p678 = scmp.lt.s32.totalorder %s32, 1
        %s679 = scalar_select %p678, %s32, 1
        %s680 = smul.addr %s679, 4
        %s681 = smul.addr %s680, 4
        %s682 = scalar_lea.vmem %s6, %s681
        %p683 = pneg %p189
        %p684 = pneg %p186
        %p685 = scmp.lt.s32.totalorder %s32, 1
        %s686 = scalar_select %p685, %s32, 1
        %s687 = scalar_lea.vmem %s7, %s686
        %p688 = pneg %p215
        %p689 = pneg %p212
        %p690 = scmp.lt.s32.totalorder %s32, 1
        %s691 = scalar_select %p690, %s32, 1
        %s692 = scalar_lea.vmem %s8, %s691
        %p693 = pneg %p241
        %p694 = pneg %p238
        %p695 = scmp.lt.s32.totalorder %s32, 1
        %s696 = scalar_select %p695, %s32, 1
        %s697 = scalar_lea.vmem %s9, %s696
        %p698 = pneg %p267
        %p699 = pneg %p264
        %p700 = scmp.lt.s32.totalorder %s32, 1
        %s701 = scalar_select %p700, %s32, 1
        %s702 = smul.addr %s701, 4
        %s703 = smul.addr %s702, 4
        %s704 = scalar_lea.vmem %s10, %s703
        %p705 = pneg %p293
        %p706 = pneg %p290
        %p707 = scmp.lt.s32.totalorder %s32, 1
        %s708 = scalar_select %p707, %s32, 1
        %s709 = scalar_lea.vmem %s11, %s708
        %p710 = pneg %p319
        %p711 = pneg %p316
        %p712 = scmp.lt.s32.totalorder %s32, 1
        %s713 = scalar_select %p712, %s32, 1
        %s714 = smul.addr %s713, 8
        %s715 = smul.addr %s714, 4
        %s716 = scalar_lea.vmem %s12, %s715
        %p717 = pneg %p345
        %p718 = pneg %p342
        %p719 = scmp.lt.s32.totalorder %s32, 1
        %s720 = scalar_select %p719, %s32, 1
        %s721 = scalar_lea.vmem %s13, %s720
        %p722 = pneg %p371
        %p723 = pneg %p368
        %p724 = scmp.lt.s32.totalorder %s32, 1
        %s725 = scalar_select %p724, %s32, 1
        %s726 = scalar_lea.vmem %s14, %s725
        %p727 = pneg %p397
        %p728 = pneg %p394
        %p729 = scmp.lt.s32.totalorder %s32, 1
        %s730 = scalar_select %p729, %s32, 1
        %s731 = scalar_lea.vmem %s15, %s730
        %p732 = pneg %p423
        %p733 = pneg %p420
        %p734 = pneg %p444
        %p735 = pneg %p441
        %p736 = pneg %p465
        %p737 = pneg %p462
        %p738 = pneg %p486
        %p739 = pneg %p483
        %p740 = pneg %p507
        %p741 = pneg %p504
        %p742 = pneg %p528
        %p743 = pneg %p525
        %p744 = scmp.lt.s32.totalorder %s32, 1
        %s745 = scalar_select %p744, %s32, 1
        %s746 = smul.addr %s745, 4
        %s747 = smul.addr %s746, 4
        %s748 = scalar_lea.vmem %s4, %s747
        %p749 = scmp.lt.s32.totalorder %s32, 1
        %s750 = scalar_select %p749, %s32, 1
        %s751 = scalar_lea.vmem %s5, %s750
        %p752 = scmp.lt.s32.totalorder %s32, 1
        %s753 = scalar_select %p752, %s32, 1
        %s754 = smul.addr %s753, 4
        %s755 = smul.addr %s754, 4
        %s756 = scalar_lea.vmem %s6, %s755
        %p757 = scmp.lt.s32.totalorder %s32, 1
        %s758 = scalar_select %p757, %s32, 1
        %s759 = scalar_lea.vmem %s7, %s758
        %p760 = scmp.lt.s32.totalorder %s32, 1
        %s761 = scalar_select %p760, %s32, 1
        %s762 = scalar_lea.vmem %s8, %s761
        %p763 = scmp.lt.s32.totalorder %s32, 1
        %s764 = scalar_select %p763, %s32, 1
        %s765 = scalar_lea.vmem %s9, %s764
        %p766 = scmp.lt.s32.totalorder %s32, 1
        %s767 = scalar_select %p766, %s32, 1
        %s768 = smul.addr %s767, 4
        %s769 = smul.addr %s768, 4
        %s770 = scalar_lea.vmem %s10, %s769
        %p771 = scmp.lt.s32.totalorder %s32, 1
        %s772 = scalar_select %p771, %s32, 1
        %s773 = scalar_lea.vmem %s11, %s772
        %p774 = scmp.lt.s32.totalorder %s32, 1
        %s775 = scalar_select %p774, %s32, 1
        %s776 = smul.addr %s775, 8
        %s777 = smul.addr %s776, 4
        %s778 = scalar_lea.vmem %s12, %s777
        %p779 = scmp.lt.s32.totalorder %s32, 1
        %s780 = scalar_select %p779, %s32, 1
        %s781 = scalar_lea.vmem %s13, %s780
        %p782 = scmp.lt.s32.totalorder %s32, 1
        %s783 = scalar_select %p782, %s32, 1
        %s784 = scalar_lea.vmem %s14, %s783
        %p785 = scmp.lt.s32.totalorder %s32, 1
        %s786 = scalar_select %p785, %s32, 1
        %s787 = scalar_lea.vmem %s15, %s786
        %p789 = scmp.eq.s32.totalorder %s32, 0
        // Predicated region
        $region101: #{bert_nli_forward.1} parent=99 // pred_check
          %p790 = pneg %p789
        $region102: #{bert_nli_forward.1} parent=99 // pred_check_branch
          %792 = sbr.rel (%p790) target = $region104
        $region103: #{bert_nli_forward.1} parent=99 // pred_region
          %v793 = vld [vmem:[%s0] sm:$0xff]
          %v794 = vld [vmem:[%s0 + $0x8] sm:$0xff]
          %v795 = vld [vmem:[%s2] sm:$0x1]
          %v796 = vld [vmem:[%s3] sm:$0x1]
          %vm797 = vcmask 261120
          %v798 = vsel %vm797, %v793, 0.0
          %799 = vadd.xlane.f32.xlu0 %v798
          %v800 = vpop.xlane.xlu0 %799
          %v801 = vsel %vm797, %v794, 0.0
          %802 = vadd.xlane.f32.xlu0 %v801
          %v803 = vpop.xlane.xlu0 %802
          %v804 = vrcp.pop 32.0
          %v805 = vmul.f32 %v800, %v804
          %v806 = vmul.f32 %v803, %v804
          %v807 = vsub.f32 %v793, %v805
          %v808 = vsub.f32 %v794, %v806
          %v809 = vmul.f32 %v807, %v807
          %v810 = vmul.f32 %v808, %v808
          %v811 = vsel %vm797, %v809, 0.0
          %812 = vadd.xlane.f32.xlu0 %v811
          %v813 = vpop.xlane.xlu0 %812
          %v814 = vsel %vm797, %v810, 0.0
          %815 = vadd.xlane.f32.xlu0 %v814
          %v816 = vpop.xlane.xlu0 %815
          %v817 = vmul.f32 %v813, %v804
          %v818 = vmul.f32 %v816, %v804
          %v819 = vadd.f32 %v817, 1e-12
          %v820 = vadd.f32 %v818, 1e-12
          %v821 = vrsqrt.pop %v819
          %v822 = vrsqrt.pop %v820
          %v823 = vmul.f32 %v807, %v821
          %v824 = vmul.f32 %v808, %v822
          %v826 = vlaneseq
          %v827 = vshrl.u32 %v826, 7
          %v828 = vsub.s32 0, %v827
          %v829 = vrot.slane %v795, %v828
          %v831 = vmul.f32 %v823, %v829
          %v832 = vmul.f32 %v824, %v829
          %v834 = vlaneseq
          %v835 = vshrl.u32 %v834, 7
          %v836 = vsub.s32 0, %v835
          %v837 = vrot.slane %v796, %v836
          %v839 = vadd.f32 %v831, %v837
          %v840 = vadd.f32 %v832, %v837
          %841 = vst.msk [vmem:[#allocation2] sm:$0xff] %vm797, %v839
          %842 = vst.msk [vmem:[#allocation2 + $0x8] sm:$0xff] %vm797, %v840
        $region104: #{bert_nli_forward.1} parent=99 // pred_fallthru
          _
        %v843 = vld [vmem:[#allocation2] sm:$0xff]
        %v844 = vld [vmem:[#allocation2 + $0x8] sm:$0xff]
        %v845 = vpack.c.bf16 %v844, %v843
        %v846 = vld [vmem:[%s748] sm:$0xf]
        %v847 = vld [vmem:[%s748 + $0x4] sm:$0xf]
        %v848 = vld [vmem:[%s748 + $0x8] sm:$0xf]
        %v849 = vld [vmem:[%s748 + $0xc] sm:$0xf]
        %v850 = vld [vmem:[%s751] sm:$0x1]
        %v852 = vlaneseq
        %v853 = vshrl.u32 %v852, 7
        %v854 = vsub.s32 0, %v853
        %v855 = vrot.slane %v850, %v854
        %v861 = vunpack.c.l.b16 %v846
        %v862 = vunpack.c.l.b16 %v847
        %v863 = vunpack.c.l.b16 %v848
        %v864 = vunpack.c.l.b16 %v849
        %v865 = vpack.c.b16 %v862, %v861
        %v866 = vpack.c.b16 %v864, %v863
        %vm869 = vcmask 261120
        %v871 = vsel %vm869, %v845, 0
        %873 = vmatprep.subr.bf16.mxu0 0
        %874 = vmatpush1.bf16.msra.mxu0 0
        %875 = vmatprep.subr.bf16.mxu0 0
        %876 = vmatpush1.bf16.msra.mxu0 0
        %877 = vmatprep.subr.bf16.mxu0 0
        %878 = vmatpush1.bf16.msra.mxu0 0
        %879 = vmatprep.subr.bf16.mxu0 0
        %880 = vmatpush1.bf16.msra.mxu0 0
        %881 = vmatprep.subr.bf16.mxu0 0
        %882 = vmatpush1.bf16.msra.mxu0 0
        %883 = vmatprep.subr.bf16.mxu0 0
        %884 = vmatpush1.bf16.msra.mxu0 0
        %885 = vmatprep.subr.bf16.mxu0 0
        %886 = vmatpush1.bf16.msra.mxu0 %v866
        %887 = vmatprep.subr.bf16.mxu0 0
        %888 = vmatpush1.bf16.msra.mxu0 %v865
        %889 = vmatprep.subr.bf16.mxu0 0
        %890 = vmatpush2.bf16.msra.mxu0 0
        %891 = vmatprep.subr.bf16.mxu0 0
        %892 = vmatpush2.bf16.msra.mxu0 0
        %893 = vmatprep.subr.bf16.mxu0 0
        %894 = vmatpush2.bf16.msra.mxu0 0
        %895 = vmatprep.subr.bf16.mxu0 0
        %896 = vmatpush2.bf16.msra.mxu0 0
        %897 = vmatprep.subr.bf16.mxu0 0
        %898 = vmatpush2.bf16.msra.mxu0 0
        %899 = vmatprep.subr.bf16.mxu0 0
        %900 = vmatpush2.bf16.msra.mxu0 0
        %901 = vmatprep.subr.bf16.mxu0 0
        %902 = vmatpush2.bf16.msra.mxu0 0
        %903 = vmatprep.subr.bf16.mxu0 0
        %904 = vmatpush2.bf16.msra.mxu0 0
        %905 = vmatprep.mubr.bf16.mxu0 0
        %906 = vmatmul.mubr.bf16.gmra.mxu0 %v871
        %v907 = vpop.f32.mrf.mxu0
        %v908 = vadd.f32 %v855, %v907
        %v909 = vpop.f32.mrf.mxu0
        %v910 = vpop.f32.mrf.mxu0
        %v911 = vadd.f32 %v855, %v910
        %v912 = vpop.f32.mrf.mxu0
        %913 = vdwg.mxu0
        %v914 = vld [vmem:[%s1] sm:$0x1]
        %v915 = vld [vmem:[%s1 + $0x1] sm:$0x1]
        %v916 = vpack.c.bf16 %v908, %v908
        %v917 = vpack.c.bf16 %v911, %v911
        %919 = vrot.lane.b32.xlu0 %v916, 96
        %v920 = vpop.permute.xlu0 %919
        %vm921 = vcmask 64512
        %v923 = vsel %vm921, %v916, 0
        %v926 = vsel %vm921, %v920, 0
        %928 = vmatprep.subr.bf16.mxu0 0
        %929 = vmatpush1.bf16.xpose.msra.mxu0 0
        %930 = vmatprep.subr.bf16.mxu0 0
        %931 = vmatpush1.bf16.xpose.msra.mxu0 0
        %932 = vmatprep.subr.bf16.mxu0 0
        %933 = vmatpush1.bf16.xpose.msra.mxu0 0
        %934 = vmatprep.subr.bf16.mxu0 0
        %935 = vmatpush1.bf16.xpose.msra.mxu0 0
        %936 = vmatprep.subr.bf16.mxu0 0
        %937 = vmatpush1.bf16.xpose.msra.mxu0 0
        %938 = vmatprep.subr.bf16.mxu0 0
        %939 = vmatpush1.bf16.xpose.msra.mxu0 0
        %940 = vmatprep.subr.bf16.mxu0 0
        %941 = vmatpush1.bf16.xpose.msra.mxu0 0
        %942 = vmatprep.subr.bf16.mxu0 0
        %943 = vmatpush1.bf16.xpose.msra.mxu0 %v926
        %944 = vmatprep.subr.bf16.mxu0 0
        %945 = vmatpush2.bf16.xpose.msra.mxu0 0
        %946 = vmatprep.subr.bf16.mxu0 0
        %947 = vmatpush2.bf16.xpose.msra.mxu0 0
        %948 = vmatprep.subr.bf16.mxu0 0
        %949 = vmatpush2.bf16.xpose.msra.mxu0 0
        %950 = vmatprep.subr.bf16.mxu0 0
        %951 = vmatpush2.bf16.xpose.msra.mxu0 0
        %952 = vmatprep.subr.bf16.mxu0 0
        %953 = vmatpush2.bf16.xpose.msra.mxu0 0
        %954 = vmatprep.subr.bf16.mxu0 0
        %955 = vmatpush2.bf16.xpose.msra.mxu0 0
        %956 = vmatprep.subr.bf16.mxu0 0
        %957 = vmatpush2.bf16.xpose.msra.mxu0 0
        %958 = vmatprep.subr.bf16.mxu0 0
        %959 = vmatpush2.bf16.xpose.msra.mxu0 0
        %960 = vmatprep.mubr.bf16.mxu0 0
        %961 = vmatmul.mubr.bf16.gmra.mxu0 %v923
        %v962 = vpop.f32.mrf.mxu0
        %v963 = vadd.f32 0.0, %v962
        %v964 = vpop.f32.mrf.mxu0
        %v965 = vpop.f32.mrf.mxu0
        %v966 = vpop.f32.mrf.mxu0
        %967 = vdwg.mxu0
        %969 = vrot.lane.b32.xlu0 %v917, 96
        %v970 = vpop.permute.xlu0 %969
        %v972 = vsel %vm921, %v917, 0
        %v975 = vsel %vm921, %v970, 0
        %977 = vmatprep.subr.bf16.mxu0 0
        %978 = vmatpush1.bf16.xpose.msra.mxu0 0
        %979 = vmatprep.subr.bf16.mxu0 0
        %980 = vmatpush1.bf16.xpose.msra.mxu0 0
        %981 = vmatprep.subr.bf16.mxu0 0
        %982 = vmatpush1.bf16.xpose.msra.mxu0 0
        %983 = vmatprep.subr.bf16.mxu0 0
        %984 = vmatpush1.bf16.xpose.msra.mxu0 0
        %985 = vmatprep.subr.bf16.mxu0 0
        %986 = vmatpush1.bf16.xpose.msra.mxu0 0
        %987 = vmatprep.subr.bf16.mxu0 0
        %988 = vmatpush1.bf16.xpose.msra.mxu0 0
        %989 = vmatprep.subr.bf16.mxu0 0
        %990 = vmatpush1.bf16.xpose.msra.mxu0 0
        %991 = vmatprep.subr.bf16.mxu0 0
        %992 = vmatpush1.bf16.xpose.msra.mxu0 %v975
        %993 = vmatprep.subr.bf16.mxu0 0
        %994 = vmatpush2.bf16.xpose.msra.mxu0 0
        %995 = vmatprep.subr.bf16.mxu0 0
        %996 = vmatpush2.bf16.xpose.msra.mxu0 0
        %997 = vmatprep.subr.bf16.mxu0 0
        %998 = vmatpush2.bf16.xpose.msra.mxu0 0
        %999 = vmatprep.subr.bf16.mxu0 0
        %1000 = vmatpush2.bf16.xpose.msra.mxu0 0
        %1001 = vmatprep.subr.bf16.mxu0 0
        %1002 = vmatpush2.bf16.xpose.msra.mxu0 0
        %1003 = vmatprep.subr.bf16.mxu0 0
        %1004 = vmatpush2.bf16.xpose.msra.mxu0 0
        %1005 = vmatprep.subr.bf16.mxu0 0
        %1006 = vmatpush2.bf16.xpose.msra.mxu0 0
        %1007 = vmatprep.subr.bf16.mxu0 0
        %1008 = vmatpush2.bf16.xpose.msra.mxu0 0
        %1009 = vmatprep.mubr.bf16.mxu0 0
        %1010 = vmatmul.mubr.bf16.gmra.mxu0 %v972
        %v1011 = vpop.f32.mrf.mxu0
        %v1012 = vadd.f32 0.0, %v1011
        %v1013 = vpop.f32.mrf.mxu0
        %v1014 = vpop.f32.mrf.mxu0
        %v1015 = vpop.f32.mrf.mxu0
        %1016 = vdwg.mxu0
        %v1017 = vmul.f32 %v963, 0.35355338
        %v1018 = vmul.f32 %v1012, 0.35355338
        %v1021 = vlaneseq
        %v1022 = vshrl.u32 %v1021, 7
        %v1023 = vsub.s32 0, %v1022
        %v1024 = vrot.slane %v914, %v1023
        %v1025 = vlaneseq
        %v1026 = vshrl.u32 %v1025, 7
        %v1027 = vsub.s32 0, %v1026
        %v1028 = vrot.slane %v915, %v1027
        %v1031 = vadd.f32 %v1017, %v1024
        %v1032 = vadd.f32 %v1018, %v1028
        %v1033 = vsel %vm921, %v1031, -inf
        %1034 = vmax.xlane.f32.xlu0 %v1033
        %v1035 = vpop.xlane.xlu0 %1034
        %v1036 = vsel %vm921, %v1032, -inf
        %1037 = vmax.xlane.f32.xlu0 %v1036
        %v1038 = vpop.xlane.xlu0 %1037
        %v1039 = vsub.f32 %v1031, %v1035
        %v1040 = vsub.f32 %v1032, %v1038
        %v1041 = vmul.f32 %v1039, 1.442695
        %v1042 = vpow.pop %v1041
        %v1043 = vmul.f32 %v1040, 1.442695
        %v1044 = vpow.pop %v1043
        %v1045 = vsel %vm921, %v1042, 0.0
        %1046 = vadd.xlane.f32.xlu0 %v1045
        %v1047 = vpop.xlane.xlu0 %1046
        %v1048 = vsel %vm921, %v1044, 0.0
        %1049 = vadd.xlane.f32.xlu0 %v1048
        %v1050 = vpop.xlane.xlu0 %1049
        %v1051 = vrcp.pop %v1047
        %v1052 = vrcp.pop %v1050
        %v1053 = vmul.f32 %v1042, %v1051
        %v1054 = vmul.f32 %v1044, %v1052
        %v1055 = vpack.c.bf16 %v1053, %v1053
        %v1056 = vpack.c.bf16 %v1054, %v1054
        %1057 = vrot.lane.b32.xlu0 %v916, 64
        %v1058 = vpop.permute.xlu0 %1057
        %v1060 = vsel %vm921, %v1055, 0
        %vm1062 = vcmask 1043456
        %v1064 = vsel %vm1062, %v1058, 0
        %1066 = vmatprep.subr.bf16.mxu0 0
        %1067 = vmatpush1.bf16.msra.mxu0 0
        %1068 = vmatprep.subr.bf16.mxu0 0
        %1069 = vmatpush1.bf16.msra.mxu0 0
        %1070 = vmatprep.subr.bf16.mxu0 0
        %1071 = vmatpush1.bf16.msra.mxu0 0
        %1072 = vmatprep.subr.bf16.mxu0 0
        %1073 = vmatpush1.bf16.msra.mxu0 0
        %1074 = vmatprep.subr.bf16.mxu0 0
        %1075 = vmatpush1.bf16.msra.mxu0 0
        %1076 = vmatprep.subr.bf16.mxu0 0
        %1077 = vmatpush1.bf16.msra.mxu0 0
        %1078 = vmatprep.subr.bf16.mxu0 0
        %1079 = vmatpush1.bf16.msra.mxu0 0
        %1080 = vmatprep.subr.bf16.mxu0 0
        %1081 = vmatpush1.bf16.msra.mxu0 %v1064
        %1082 = vmatprep.subr.bf16.mxu0 0
        %1083 = vmatpush2.bf16.msra.mxu0 0
        %1084 = vmatprep.subr.bf16.mxu0 0
        %1085 = vmatpush2.bf16.msra.mxu0 0
        %1086 = vmatprep.subr.bf16.mxu0 0
        %1087 = vmatpush2.bf16.msra.mxu0 0
        %1088 = vmatprep.subr.bf16.mxu0 0
        %1089 = vmatpush2.bf16.msra.mxu0 0
        %1090 = vmatprep.subr.bf16.mxu0 0
        %1091 = vmatpush2.bf16.msra.mxu0 0
        %1092 = vmatprep.subr.bf16.mxu0 0
        %1093 = vmatpush2.bf16.msra.mxu0 0
        %1094 = vmatprep.subr.bf16.mxu0 0
        %1095 = vmatpush2.bf16.msra.mxu0 0
        %1096 = vmatprep.subr.bf16.mxu0 0
        %1097 = vmatpush2.bf16.msra.mxu0 0
        %1098 = vmatprep.mubr.bf16.mxu0 0
        %1099 = vmatmul.mubr.bf16.gmra.mxu0 %v1060
        %v1100 = vpop.f32.mrf.mxu0
        %v1101 = vadd.f32 0.0, %v1100
        %v1102 = vpop.f32.mrf.mxu0
        %v1103 = vpop.f32.mrf.mxu0
        %v1104 = vpop.f32.mrf.mxu0
        %1105 = vdwg.mxu0
        %1106 = vrot.lane.b32.xlu0 %v917, 64
        %v1107 = vpop.permute.xlu0 %1106
        %v1109 = vsel %vm921, %v1056, 0
        %v1112 = vsel %vm1062, %v1107, 0
        %1114 = vmatprep.subr.bf16.mxu0 0
        %1115 = vmatpush1.bf16.msra.mxu0 0
        %1116 = vmatprep.subr.bf16.mxu0 0
        %1117 = vmatpush1.bf16.msra.mxu0 0
        %1118 = vmatprep.subr.bf16.mxu0 0
        %1119 = vmatpush1.bf16.msra.mxu0 0
        %1120 = vmatprep.subr.bf16.mxu0 0
        %1121 = vmatpush1.bf16.msra.mxu0 0
        %1122 = vmatprep.subr.bf16.mxu0 0
        %1123 = vmatpush1.bf16.msra.mxu0 0
        %1124 = vmatprep.subr.bf16.mxu0 0
        %1125 = vmatpush1.bf16.msra.mxu0 0
        %1126 = vmatprep.subr.bf16.mxu0 0
        %1127 = vmatpush1.bf16.msra.mxu0 0
        %1128 = vmatprep.subr.bf16.mxu0 0
        %1129 = vmatpush1.bf16.msra.mxu0 %v1112
        %1130 = vmatprep.subr.bf16.mxu0 0
        %1131 = vmatpush2.bf16.msra.mxu0 0
        %1132 = vmatprep.subr.bf16.mxu0 0
        %1133 = vmatpush2.bf16.msra.mxu0 0
        %1134 = vmatprep.subr.bf16.mxu0 0
        %1135 = vmatpush2.bf16.msra.mxu0 0
        %1136 = vmatprep.subr.bf16.mxu0 0
        %1137 = vmatpush2.bf16.msra.mxu0 0
        %1138 = vmatprep.subr.bf16.mxu0 0
        %1139 = vmatpush2.bf16.msra.mxu0 0
        %1140 = vmatprep.subr.bf16.mxu0 0
        %1141 = vmatpush2.bf16.msra.mxu0 0
        %1142 = vmatprep.subr.bf16.mxu0 0
        %1143 = vmatpush2.bf16.msra.mxu0 0
        %1144 = vmatprep.subr.bf16.mxu0 0
        %1145 = vmatpush2.bf16.msra.mxu0 0
        %1146 = vmatprep.mubr.bf16.mxu0 0
        %1147 = vmatmul.mubr.bf16.gmra.mxu0 %v1109
        %v1148 = vpop.f32.mrf.mxu0
        %v1149 = vadd.f32 0.0, %v1148
        %v1150 = vpop.f32.mrf.mxu0
        %v1151 = vpop.f32.mrf.mxu0
        %v1152 = vpop.f32.mrf.mxu0
        %1153 = vdwg.mxu0
        %1154 = vrot.lane.b32.xlu0 %v916, 120
        %v1155 = vpop.permute.xlu0 %1154
        %1156 = vrot.lane.b32.xlu0 %v916, 88
        %v1157 = vpop.permute.xlu0 %1156
        %v1159 = vsel %vm921, %v1155, 0
        %v1162 = vsel %vm921, %v1157, 0
        %1164 = vmatprep.subr.bf16.mxu0 0
        %1165 = vmatpush1.bf16.xpose.msra.mxu0 0
        %1166 = vmatprep.subr.bf16.mxu0 0
        %1167 = vmatpush1.bf16.xpose.msra.mxu0 0
        %1168 = vmatprep.subr.bf16.mxu0 0
        %1169 = vmatpush1.bf16.xpose.msra.mxu0 0
        %1170 = vmatprep.subr.bf16.mxu0 0
        %1171 = vmatpush1.bf16.xpose.msra.mxu0 0
        %1172 = vmatprep.subr.bf16.mxu0 0
        %1173 = vmatpush1.bf16.xpose.msra.mxu0 0
        %1174 = vmatprep.subr.bf16.mxu0 0
        %1175 = vmatpush1.bf16.xpose.msra.mxu0 0
        %1176 = vmatprep.subr.bf16.mxu0 0
        %1177 = vmatpush1.bf16.xpose.msra.mxu0 0
        %1178 = vmatprep.subr.bf16.mxu0 0
        %1179 = vmatpush1.bf16.xpose.msra.mxu0 %v1162
        %1180 = vmatprep.subr.bf16.mxu0 0
        %1181 = vmatpush2.bf16.xpose.msra.mxu0 0
        %1182 = vmatprep.subr.bf16.mxu0 0
        %1183 = vmatpush2.bf16.xpose.msra.mxu0 0
        %1184 = vmatprep.subr.bf16.mxu0 0
        %1185 = vmatpush2.bf16.xpose.msra.mxu0 0
        %1186 = vmatprep.subr.bf16.mxu0 0
        %1187 = vmatpush2.bf16.xpose.msra.mxu0 0
        %1188 = vmatprep.subr.bf16.mxu0 0
        %1189 = vmatpush2.bf16.xpose.msra.mxu0 0
        %1190 = vmatprep.subr.bf16.mxu0 0
        %1191 = vmatpush2.bf16.xpose.msra.mxu0 0
        %1192 = vmatprep.subr.bf16.mxu0 0
        %1193 = vmatpush2.bf16.xpose.msra.mxu0 0
        %1194 = vmatprep.subr.bf16.mxu0 0
        %1195 = vmatpush2.bf16.xpose.msra.mxu0 0
        %1196 = vmatprep.mubr.bf16.mxu0 0
        %1197 = vmatmul.mubr.bf16.gmra.mxu0 %v1159
        %v1198 = vpop.f32.mrf.mxu0
        %v1199 = vadd.f32 0.0, %v1198
        %v1200 = vpop.f32.mrf.mxu0
        %v1201 = vpop.f32.mrf.mxu0
        %v1202 = vpop.f32.mrf.mxu0
        %1203 = vdwg.mxu0
        %1204 = vrot.lane.b32.xlu0 %v917, 120
        %v1205 = vpop.permute.xlu0 %1204
        %1206 = vrot.lane.b32.xlu0 %v917, 88
        %v1207 = vpop.permute.xlu0 %1206
        %v1209 = vsel %vm921, %v1205, 0
        %v1212 = vsel %vm921, %v1207, 0
        %1214 = vmatprep.subr.bf16.mxu0 0
        %1215 = vmatpush1.bf16.xpose.msra.mxu0 0
        %1216 = vmatprep.subr.bf16.mxu0 0
        %1217 = vmatpush1.bf16.xpose.msra.mxu0 0
        %1218 = vmatprep.subr.bf16.mxu0 0
        %1219 = vmatpush1.bf16.xpose.msra.mxu0 0
        %1220 = vmatprep.subr.bf16.mxu0 0
        %1221 = vmatpush1.bf16.xpose.msra.mxu0 0
        %1222 = vmatprep.subr.bf16.mxu0 0
        %1223 = vmatpush1.bf16.xpose.msra.mxu0 0
        %1224 = vmatprep.subr.bf16.mxu0 0
        %1225 = vmatpush1.bf16.xpose.msra.mxu0 0
        %1226 = vmatprep.subr.bf16.mxu0 0
        %1227 = vmatpush1.bf16.xpose.msra.mxu0 0
        %1228 = vmatprep.subr.bf16.mxu0 0
        %1229 = vmatpush1.bf16.xpose.msra.mxu0 %v1212
        %1230 = vmatprep.subr.bf16.mxu0 0
        %1231 = vmatpush2.bf16.xpose.msra.mxu0 0
        %1232 = vmatprep.subr.bf16.mxu0 0
        %1233 = vmatpush2.bf16.xpose.msra.mxu0 0
        %1234 = vmatprep.subr.bf16.mxu0 0
        %1235 = vmatpush2.bf16.xpose.msra.mxu0 0
        %1236 = vmatprep.subr.bf16.mxu0 0
        %1237 = vmatpush2.bf16.xpose.msra.mxu0 0
        %1238 = vmatprep.subr.bf16.mxu0 0
        %1239 = vmatpush2.bf16.xpose.msra.mxu0 0
        %1240 = vmatprep.subr.bf16.mxu0 0
        %1241 = vmatpush2.bf16.xpose.msra.mxu0 0
        %1242 = vmatprep.subr.bf16.mxu0 0
        %1243 = vmatpush2.bf16.xpose.msra.mxu0 0
        %1244 = vmatprep.subr.bf16.mxu0 0
        %1245 = vmatpush2.bf16.xpose.msra.mxu0 0
        %1246 = vmatprep.mubr.bf16.mxu0 0
        %1247 = vmatmul.mubr.bf16.gmra.mxu0 %v1209
        %v1248 = vpop.f32.mrf.mxu0
        %v1249 = vadd.f32 0.0, %v1248
        %v1250 = vpop.f32.mrf.mxu0
        %v1251 = vpop.f32.mrf.mxu0
        %v1252 = vpop.f32.mrf.mxu0
        %1253 = vdwg.mxu0
        %v1254 = vmul.f32 %v1199, 0.35355338
        %v1255 = vmul.f32 %v1249, 0.35355338
        %v1256 = vadd.f32 %v1254, %v1024
        %v1257 = vadd.f32 %v1255, %v1028
        %v1258 = vsel %vm921, %v1256, -inf
        %1259 = vmax.xlane.f32.xlu0 %v1258
        %v1260 = vpop.xlane.xlu0 %1259
        %v1261 = vsel %vm921, %v1257, -inf
        %1262 = vmax.xlane.f32.xlu0 %v1261
        %v1263 = vpop.xlane.xlu0 %1262
        %v1264 = vsub.f32 %v1256, %v1260
        %v1265 = vsub.f32 %v1257, %v1263
        %v1266 = vmul.f32 %v1264, 1.442695
        %v1267 = vpow.pop %v1266
        %v1268 = vmul.f32 %v1265, 1.442695
        %v1269 = vpow.pop %v1268
        %v1270 = vsel %vm921, %v1267, 0.0
        %1271 = vadd.xlane.f32.xlu0 %v1270
        %v1272 = vpop.xlane.xlu0 %1271
        %v1273 = vsel %vm921, %v1269, 0.0
        %1274 = vadd.xlane.f32.xlu0 %v1273
        %v1275 = vpop.xlane.xlu0 %1274
        %v1276 = vrcp.pop %v1272
        %v1277 = vrcp.pop %v1275
        %v1278 = vmul.f32 %v1267, %v1276
        %v1279 = vmul.f32 %v1269, %v1277
        %v1280 = vpack.c.bf16 %v1278, %v1278
        %v1281 = vpack.c.bf16 %v1279, %v1279
        %1282 = vrot.lane.b32.xlu0 %v916, 56
        %v1283 = vpop.permute.xlu0 %1282
        %v1285 = vsel %vm921, %v1280, 0
        %v1288 = vsel %vm1062, %v1283, 0
        %1290 = vmatprep.subr.bf16.mxu0 0
        %1291 = vmatpush1.bf16.msra.mxu0 0
        %1292 = vmatprep.subr.bf16.mxu0 0
        %1293 = vmatpush1.bf16.msra.mxu0 0
        %1294 = vmatprep.subr.bf16.mxu0 0
        %1295 = vmatpush1.bf16.msra.mxu0 0
        %1296 = vmatprep.subr.bf16.mxu0 0
        %1297 = vmatpush1.bf16.msra.mxu0 0
        %1298 = vmatprep.subr.bf16.mxu0 0
        %1299 = vmatpush1.bf16.msra.mxu0 0
        %1300 = vmatprep.subr.bf16.mxu0 0
        %1301 = vmatpush1.bf16.msra.mxu0 0
        %1302 = vmatprep.subr.bf16.mxu0 0
        %1303 = vmatpush1.bf16.msra.mxu0 0
        %1304 = vmatprep.subr.bf16.mxu0 0
        %1305 = vmatpush1.bf16.msra.mxu0 %v1288
        %1306 = vmatprep.subr.bf16.mxu0 0
        %1307 = vmatpush2.bf16.msra.mxu0 0
        %1308 = vmatprep.subr.bf16.mxu0 0
        %1309 = vmatpush2.bf16.msra.mxu0 0
        %1310 = vmatprep.subr.bf16.mxu0 0
        %1311 = vmatpush2.bf16.msra.mxu0 0
        %1312 = vmatprep.subr.bf16.mxu0 0
        %1313 = vmatpush2.bf16.msra.mxu0 0
        %1314 = vmatprep.subr.bf16.mxu0 0
        %1315 = vmatpush2.bf16.msra.mxu0 0
        %1316 = vmatprep.subr.bf16.mxu0 0
        %1317 = vmatpush2.bf16.msra.mxu0 0
        %1318 = vmatprep.subr.bf16.mxu0 0
        %1319 = vmatpush2.bf16.msra.mxu0 0
        %1320 = vmatprep.subr.bf16.mxu0 0
        %1321 = vmatpush2.bf16.msra.mxu0 0
        %1322 = vmatprep.mubr.bf16.mxu0 0
        %1323 = vmatmul.mubr.bf16.gmra.mxu0 %v1285
        %v1324 = vpop.f32.mrf.mxu0
        %v1325 = vadd.f32 0.0, %v1324
        %v1326 = vpop.f32.mrf.mxu0
        %v1327 = vpop.f32.mrf.mxu0
        %v1328 = vpop.f32.mrf.mxu0
        %1329 = vdwg.mxu0
        %1330 = vrot.lane.b32.xlu0 %v917, 56
        %v1331 = vpop.permute.xlu0 %1330
        %v1333 = vsel %vm921, %v1281, 0
        %v1336 = vsel %vm1062, %v1331, 0
        %1338 = vmatprep.subr.bf16.mxu0 0
        %1339 = vmatpush1.bf16.msra.mxu0 0
        %1340 = vmatprep.subr.bf16.mxu0 0
        %1341 = vmatpush1.bf16.msra.mxu0 0
        %1342 = vmatprep.subr.bf16.mxu0 0
        %1343 = vmatpush1.bf16.msra.mxu0 0
        %1344 = vmatprep.subr.bf16.mxu0 0
        %1345 = vmatpush1.bf16.msra.mxu0 0
        %1346 = vmatprep.subr.bf16.mxu0 0
        %1347 = vmatpush1.bf16.msra.mxu0 0
        %1348 = vmatprep.subr.bf16.mxu0 0
        %1349 = vmatpush1.bf16.msra.mxu0 0
        %1350 = vmatprep.subr.bf16.mxu0 0
        %1351 = vmatpush1.bf16.msra.mxu0 0
        %1352 = vmatprep.subr.bf16.mxu0 0
        %1353 = vmatpush1.bf16.msra.mxu0 %v1336
        %1354 = vmatprep.subr.bf16.mxu0 0
        %1355 = vmatpush2.bf16.msra.mxu0 0
        %1356 = vmatprep.subr.bf16.mxu0 0
        %1357 = vmatpush2.bf16.msra.mxu0 0
        %1358 = vmatprep.subr.bf16.mxu0 0
        %1359 = vmatpush2.bf16.msra.mxu0 0
        %1360 = vmatprep.subr.bf16.mxu0 0
        %1361 = vmatpush2.bf16.msra.mxu0 0
        %1362 = vmatprep.subr.bf16.mxu0 0
        %1363 = vmatpush2.bf16.msra.mxu0 0
        %1364 = vmatprep.subr.bf16.mxu0 0
        %1365 = vmatpush2.bf16.msra.mxu0 0
        %1366 = vmatprep.subr.bf16.mxu0 0
        %1367 = vmatpush2.bf16.msra.mxu0 0
        %1368 = vmatprep.subr.bf16.mxu0 0
        %1369 = vmatpush2.bf16.msra.mxu0 0
        %1370 = vmatprep.mubr.bf16.mxu0 0
        %1371 = vmatmul.mubr.bf16.gmra.mxu0 %v1333
        %v1372 = vpop.f32.mrf.mxu0
        %v1373 = vadd.f32 0.0, %v1372
        %v1374 = vpop.f32.mrf.mxu0
        %v1375 = vpop.f32.mrf.mxu0
        %v1376 = vpop.f32.mrf.mxu0
        %1377 = vdwg.mxu0
        %1378 = vrot.lane.b32.xlu0 %v916, 112
        %v1379 = vpop.permute.xlu0 %1378
        %1380 = vrot.lane.b32.xlu0 %v916, 80
        %v1381 = vpop.permute.xlu0 %1380
        %v1383 = vsel %vm921, %v1379, 0
        %v1386 = vsel %vm921, %v1381, 0
        %1388 = vmatprep.subr.bf16.mxu0 0
        %1389 = vmatpush1.bf16.xpose.msra.mxu0 0
        %1390 = vmatprep.subr.bf16.mxu0 0
        %1391 = vmatpush1.bf16.xpose.msra.mxu0 0
        %1392 = vmatprep.subr.bf16.mxu0 0
        %1393 = vmatpush1.bf16.xpose.msra.mxu0 0
        %1394 = vmatprep.subr.bf16.mxu0 0
        %1395 = vmatpush1.bf16.xpose.msra.mxu0 0
        %1396 = vmatprep.subr.bf16.mxu0 0
        %1397 = vmatpush1.bf16.xpose.msra.mxu0 0
        %1398 = vmatprep.subr.bf16.mxu0 0
        %1399 = vmatpush1.bf16.xpose.msra.mxu0 0
        %1400 = vmatprep.subr.bf16.mxu0 0
        %1401 = vmatpush1.bf16.xpose.msra.mxu0 0
        %1402 = vmatprep.subr.bf16.mxu0 0
        %1403 = vmatpush1.bf16.xpose.msra.mxu0 %v1386
        %1404 = vmatprep.subr.bf16.mxu0 0
        %1405 = vmatpush2.bf16.xpose.msra.mxu0 0
        %1406 = vmatprep.subr.bf16.mxu0 0
        %1407 = vmatpush2.bf16.xpose.msra.mxu0 0
        %1408 = vmatprep.subr.bf16.mxu0 0
        %1409 = vmatpush2.bf16.xpose.msra.mxu0 0
        %1410 = vmatprep.subr.bf16.mxu0 0
        %1411 = vmatpush2.bf16.xpose.msra.mxu0 0
        %1412 = vmatprep.subr.bf16.mxu0 0
        %1413 = vmatpush2.bf16.xpose.msra.mxu0 0
        %1414 = vmatprep.subr.bf16.mxu0 0
        %1415 = vmatpush2.bf16.xpose.msra.mxu0 0
        %1416 = vmatprep.subr.bf16.mxu0 0
        %1417 = vmatpush2.bf16.xpose.msra.mxu0 0
        %1418 = vmatprep.subr.bf16.mxu0 0
        %1419 = vmatpush2.bf16.xpose.msra.mxu0 0
        %1420 = vmatprep.mubr.bf16.mxu0 0
        %1421 = vmatmul.mubr.bf16.gmra.mxu0 %v1383
        %v1422 = vpop.f32.mrf.mxu0
        %v1423 = vadd.f32 0.0, %v1422
        %v1424 = vpop.f32.mrf.mxu0
        %v1425 = vpop.f32.mrf.mxu0
        %v1426 = vpop.f32.mrf.mxu0
        %1427 = vdwg.mxu0
        %1428 = vrot.lane.b32.xlu0 %v917, 112
        %v1429 = vpop.permute.xlu0 %1428
        %1430 = vrot.lane.b32.xlu0 %v917, 80
        %v1431 = vpop.permute.xlu0 %1430
        %v1433 = vsel %vm921, %v1429, 0
        %v1436 = vsel %vm921, %v1431, 0
        %1438 = vmatprep.subr.bf16.mxu0 0
        %1439 = vmatpush1.bf16.xpose.msra.mxu0 0
        %1440 = vmatprep.subr.bf16.mxu0 0
        %1441 = vmatpush1.bf16.xpose.msra.mxu0 0
        %1442 = vmatprep.subr.bf16.mxu0 0
        %1443 = vmatpush1.bf16.xpose.msra.mxu0 0
        %1444 = vmatprep.subr.bf16.mxu0 0
        %1445 = vmatpush1.bf16.xpose.msra.mxu0 0
        %1446 = vmatprep.subr.bf16.mxu0 0
        %1447 = vmatpush1.bf16.xpose.msra.mxu0 0
        %1448 = vmatprep.subr.bf16.mxu0 0
        %1449 = vmatpush1.bf16.xpose.msra.mxu0 0
        %1450 = vmatprep.subr.bf16.mxu0 0
        %1451 = vmatpush1.bf16.xpose.msra.mxu0 0
        %1452 = vmatprep.subr.bf16.mxu0 0
        %1453 = vmatpush1.bf16.xpose.msra.mxu0 %v1436
        %1454 = vmatprep.subr.bf16.mxu0 0
        %1455 = vmatpush2.bf16.xpose.msra.mxu0 0
        %1456 = vmatprep.subr.bf16.mxu0 0
        %1457 = vmatpush2.bf16.xpose.msra.mxu0 0
        %1458 = vmatprep.subr.bf16.mxu0 0
        %1459 = vmatpush2.bf16.xpose.msra.mxu0 0
        %1460 = vmatprep.subr.bf16.mxu0 0
        %1461 = vmatpush2.bf16.xpose.msra.mxu0 0
        %1462 = vmatprep.subr.bf16.mxu0 0
        %1463 = vmatpush2.bf16.xpose.msra.mxu0 0
        %1464 = vmatprep.subr.bf16.mxu0 0
        %1465 = vmatpush2.bf16.xpose.msra.mxu0 0
        %1466 = vmatprep.subr.bf16.mxu0 0
        %1467 = vmatpush2.bf16.xpose.msra.mxu0 0
        %1468 = vmatprep.subr.bf16.mxu0 0
        %1469 = vmatpush2.bf16.xpose.msra.mxu0 0
        %1470 = vmatprep.mubr.bf16.mxu0 0
        %1471 = vmatmul.mubr.bf16.gmra.mxu0 %v1433
        %v1472 = vpop.f32.mrf.mxu0
        %v1473 = vadd.f32 0.0, %v1472
        %v1474 = vpop.f32.mrf.mxu0
        %v1475 = vpop.f32.mrf.mxu0
        %v1476 = vpop.f32.mrf.mxu0
        %1477 = vdwg.mxu0
        %v1478 = vmul.f32 %v1423, 0.35355338
        %v1479 = vmul.f32 %v1473, 0.35355338
        %v1480 = vadd.f32 %v1478, %v1024
        %v1481 = vadd.f32 %v1479, %v1028
        %v1482 = vsel %vm921, %v1480, -inf
        %1483 = vmax.xlane.f32.xlu0 %v1482
        %v1484 = vpop.xlane.xlu0 %1483
        %v1485 = vsel %vm921, %v1481, -inf
        %1486 = vmax.xlane.f32.xlu0 %v1485
        %v1487 = vpop.xlane.xlu0 %1486
        %v1488 = vsub.f32 %v1480, %v1484
        %v1489 = vsub.f32 %v1481, %v1487
        %v1490 = vmul.f32 %v1488, 1.442695
        %v1491 = vpow.pop %v1490
        %v1492 = vmul.f32 %v1489, 1.442695
        %v1493 = vpow.pop %v1492
        %v1494 = vsel %vm921, %v1491, 0.0
        %1495 = vadd.xlane.f32.xlu0 %v1494
        %v1496 = vpop.xlane.xlu0 %1495
        %v1497 = vsel %vm921, %v1493, 0.0
        %1498 = vadd.xlane.f32.xlu0 %v1497
        %v1499 = vpop.xlane.xlu0 %1498
        %v1500 = vrcp.pop %v1496
        %v1501 = vrcp.pop %v1499
        %v1502 = vmul.f32 %v1491, %v1500
        %v1503 = vmul.f32 %v1493, %v1501
        %v1504 = vpack.c.bf16 %v1502, %v1502
        %v1505 = vpack.c.bf16 %v1503, %v1503
        %1506 = vrot.lane.b32.xlu0 %v916, 48
        %v1507 = vpop.permute.xlu0 %1506
        %v1509 = vsel %vm921, %v1504, 0
        %v1512 = vsel %vm1062, %v1507, 0
        %1514 = vmatprep.subr.bf16.mxu0 0
        %1515 = vmatpush1.bf16.msra.mxu0 0
        %1516 = vmatprep.subr.bf16.mxu0 0
        %1517 = vmatpush1.bf16.msra.mxu0 0
        %1518 = vmatprep.subr.bf16.mxu0 0
        %1519 = vmatpush1.bf16.msra.mxu0 0
        %1520 = vmatprep.subr.bf16.mxu0 0
        %1521 = vmatpush1.bf16.msra.mxu0 0
        %1522 = vmatprep.subr.bf16.mxu0 0
        %1523 = vmatpush1.bf16.msra.mxu0 0
        %1524 = vmatprep.subr.bf16.mxu0 0
        %1525 = vmatpush1.bf16.msra.mxu0 0
        %1526 = vmatprep.subr.bf16.mxu0 0
        %1527 = vmatpush1.bf16.msra.mxu0 0
        %1528 = vmatprep.subr.bf16.mxu0 0
        %1529 = vmatpush1.bf16.msra.mxu0 %v1512
        %1530 = vmatprep.subr.bf16.mxu0 0
        %1531 = vmatpush2.bf16.msra.mxu0 0
        %1532 = vmatprep.subr.bf16.mxu0 0
        %1533 = vmatpush2.bf16.msra.mxu0 0
        %1534 = vmatprep.subr.bf16.mxu0 0
        %1535 = vmatpush2.bf16.msra.mxu0 0
        %1536 = vmatprep.subr.bf16.mxu0 0
        %1537 = vmatpush2.bf16.msra.mxu0 0
        %1538 = vmatprep.subr.bf16.mxu0 0
        %1539 = vmatpush2.bf16.msra.mxu0 0
        %1540 = vmatprep.subr.bf16.mxu0 0
        %1541 = vmatpush2.bf16.msra.mxu0 0
        %1542 = vmatprep.subr.bf16.mxu0 0
        %1543 = vmatpush2.bf16.msra.mxu0 0
        %1544 = vmatprep.subr.bf16.mxu0 0
        %1545 = vmatpush2.bf16.msra.mxu0 0
        %1546 = vmatprep.mubr.bf16.mxu0 0
        %1547 = vmatmul.mubr.bf16.gmra.mxu0 %v1509
        %v1548 = vpop.f32.mrf.mxu0
        %v1549 = vadd.f32 0.0, %v1548
        %v1550 = vpop.f32.mrf.mxu0
        %v1551 = vpop.f32.mrf.mxu0
        %v1552 = vpop.f32.mrf.mxu0
        %1553 = vdwg.mxu0
        %1554 = vrot.lane.b32.xlu0 %v917, 48
        %v1555 = vpop.permute.xlu0 %1554
        %v1557 = vsel %vm921, %v1505, 0
        %v1560 = vsel %vm1062, %v1555, 0
        %1562 = vmatprep.subr.bf16.mxu0 0
        %1563 = vmatpush1.bf16.msra.mxu0 0
        %1564 = vmatprep.subr.bf16.mxu0 0
        %1565 = vmatpush1.bf16.msra.mxu0 0
        %1566 = vmatprep.subr.bf16.mxu0 0
        %1567 = vmatpush1.bf16.msra.mxu0 0
        %1568 = vmatprep.subr.bf16.mxu0 0
        %1569 = vmatpush1.bf16.msra.mxu0 0
        %1570 = vmatprep.subr.bf16.mxu0 0
        %1571 = vmatpush1.bf16.msra.mxu0 0
        %1572 = vmatprep.subr.bf16.mxu0 0
        %1573 = vmatpush1.bf16.msra.mxu0 0
        %1574 = vmatprep.subr.bf16.mxu0 0
        %1575 = vmatpush1.bf16.msra.mxu0 0
        %1576 = vmatprep.subr.bf16.mxu0 0
        %1577 = vmatpush1.bf16.msra.mxu0 %v1560
        %1578 = vmatprep.subr.bf16.mxu0 0
        %1579 = vmatpush2.bf16.msra.mxu0 0
        %1580 = vmatprep.subr.bf16.mxu0 0
        %1581 = vmatpush2.bf16.msra.mxu0 0
        %1582 = vmatprep.subr.bf16.mxu0 0
        %1583 = vmatpush2.bf16.msra.mxu0 0
        %1584 = vmatprep.subr.bf16.mxu0 0
        %1585 = vmatpush2.bf16.msra.mxu0 0
        %1586 = vmatprep.subr.bf16.mxu0 0
        %1587 = vmatpush2.bf16.msra.mxu0 0
        %1588 = vmatprep.subr.bf16.mxu0 0
        %1589 = vmatpush2.bf16.msra.mxu0 0
        %1590 = vmatprep.subr.bf16.mxu0 0
        %1591 = vmatpush2.bf16.msra.mxu0 0
        %1592 = vmatprep.subr.bf16.mxu0 0
        %1593 = vmatpush2.bf16.msra.mxu0 0
        %1594 = vmatprep.mubr.bf16.mxu0 0
        %1595 = vmatmul.mubr.bf16.gmra.mxu0 %v1557
        %v1596 = vpop.f32.mrf.mxu0
        %v1597 = vadd.f32 0.0, %v1596
        %v1598 = vpop.f32.mrf.mxu0
        %v1599 = vpop.f32.mrf.mxu0
        %v1600 = vpop.f32.mrf.mxu0
        %1601 = vdwg.mxu0
        %1602 = vrot.lane.b32.xlu0 %v916, 104
        %v1603 = vpop.permute.xlu0 %1602
        %1604 = vrot.lane.b32.xlu0 %v916, 72
        %v1605 = vpop.permute.xlu0 %1604
        %v1607 = vsel %vm921, %v1603, 0
        %v1610 = vsel %vm921, %v1605, 0
        %1612 = vmatprep.subr.bf16.mxu0 0
        %1613 = vmatpush1.bf16.xpose.msra.mxu0 0
        %1614 = vmatprep.subr.bf16.mxu0 0
        %1615 = vmatpush1.bf16.xpose.msra.mxu0 0
        %1616 = vmatprep.subr.bf16.mxu0 0
        %1617 = vmatpush1.bf16.xpose.msra.mxu0 0
        %1618 = vmatprep.subr.bf16.mxu0 0
        %1619 = vmatpush1.bf16.xpose.msra.mxu0 0
        %1620 = vmatprep.subr.bf16.mxu0 0
        %1621 = vmatpush1.bf16.xpose.msra.mxu0 0
        %1622 = vmatprep.subr.bf16.mxu0 0
        %1623 = vmatpush1.bf16.xpose.msra.mxu0 0
        %1624 = vmatprep.subr.bf16.mxu0 0
        %1625 = vmatpush1.bf16.xpose.msra.mxu0 0
        %1626 = vmatprep.subr.bf16.mxu0 0
        %1627 = vmatpush1.bf16.xpose.msra.mxu0 %v1610
        %1628 = vmatprep.subr.bf16.mxu0 0
        %1629 = vmatpush2.bf16.xpose.msra.mxu0 0
        %1630 = vmatprep.subr.bf16.mxu0 0
        %1631 = vmatpush2.bf16.xpose.msra.mxu0 0
        %1632 = vmatprep.subr.bf16.mxu0 0
        %1633 = vmatpush2.bf16.xpose.msra.mxu0 0
        %1634 = vmatprep.subr.bf16.mxu0 0
        %1635 = vmatpush2.bf16.xpose.msra.mxu0 0
        %1636 = vmatprep.subr.bf16.mxu0 0
        %1637 = vmatpush2.bf16.xpose.msra.mxu0 0
        %1638 = vmatprep.subr.bf16.mxu0 0
        %1639 = vmatpush2.bf16.xpose.msra.mxu0 0
        %1640 = vmatprep.subr.bf16.mxu0 0
        %1641 = vmatpush2.bf16.xpose.msra.mxu0 0
        %1642 = vmatprep.subr.bf16.mxu0 0
        %1643 = vmatpush2.bf16.xpose.msra.mxu0 0
        %1644 = vmatprep.mubr.bf16.mxu0 0
        %1645 = vmatmul.mubr.bf16.gmra.mxu0 %v1607
        %v1646 = vpop.f32.mrf.mxu0
        %v1647 = vadd.f32 0.0, %v1646
        %v1648 = vpop.f32.mrf.mxu0
        %v1649 = vpop.f32.mrf.mxu0
        %v1650 = vpop.f32.mrf.mxu0
        %1651 = vdwg.mxu0
        %1652 = vrot.lane.b32.xlu0 %v917, 104
        %v1653 = vpop.permute.xlu0 %1652
        %1654 = vrot.lane.b32.xlu0 %v917, 72
        %v1655 = vpop.permute.xlu0 %1654
        %v1657 = vsel %vm921, %v1653, 0
        %v1660 = vsel %vm921, %v1655, 0
        %1662 = vmatprep.subr.bf16.mxu0 0
        %1663 = vmatpush1.bf16.xpose.msra.mxu0 0
        %1664 = vmatprep.subr.bf16.mxu0 0
        %1665 = vmatpush1.bf16.xpose.msra.mxu0 0
        %1666 = vmatprep.subr.bf16.mxu0 0
        %1667 = vmatpush1.bf16.xpose.msra.mxu0 0
        %1668 = vmatprep.subr.bf16.mxu0 0
        %1669 = vmatpush1.bf16.xpose.msra.mxu0 0
        %1670 = vmatprep.subr.bf16.mxu0 0
        %1671 = vmatpush1.bf16.xpose.msra.mxu0 0
        %1672 = vmatprep.subr.bf16.mxu0 0
        %1673 = vmatpush1.bf16.xpose.msra.mxu0 0
        %1674 = vmatprep.subr.bf16.mxu0 0
        %1675 = vmatpush1.bf16.xpose.msra.mxu0 0
        %1676 = vmatprep.subr.bf16.mxu0 0
        %1677 = vmatpush1.bf16.xpose.msra.mxu0 %v1660
        %1678 = vmatprep.subr.bf16.mxu0 0
        %1679 = vmatpush2.bf16.xpose.msra.mxu0 0
        %1680 = vmatprep.subr.bf16.mxu0 0
        %1681 = vmatpush2.bf16.xpose.msra.mxu0 0
        %1682 = vmatprep.subr.bf16.mxu0 0
        %1683 = vmatpush2.bf16.xpose.msra.mxu0 0
        %1684 = vmatprep.subr.bf16.mxu0 0
        %1685 = vmatpush2.bf16.xpose.msra.mxu0 0
        %1686 = vmatprep.subr.bf16.mxu0 0
        %1687 = vmatpush2.bf16.xpose.msra.mxu0 0
        %1688 = vmatprep.subr.bf16.mxu0 0
        %1689 = vmatpush2.bf16.xpose.msra.mxu0 0
        %1690 = vmatprep.subr.bf16.mxu0 0
        %1691 = vmatpush2.bf16.xpose.msra.mxu0 0
        %1692 = vmatprep.subr.bf16.mxu0 0
        %1693 = vmatpush2.bf16.xpose.msra.mxu0 0
        %1694 = vmatprep.mubr.bf16.mxu0 0
        %1695 = vmatmul.mubr.bf16.gmra.mxu0 %v1657
        %v1696 = vpop.f32.mrf.mxu0
        %v1697 = vadd.f32 0.0, %v1696
        %v1698 = vpop.f32.mrf.mxu0
        %v1699 = vpop.f32.mrf.mxu0
        %v1700 = vpop.f32.mrf.mxu0
        %1701 = vdwg.mxu0
        %v1702 = vmul.f32 %v1647, 0.35355338
        %v1703 = vmul.f32 %v1697, 0.35355338
        %v1704 = vadd.f32 %v1702, %v1024
        %v1705 = vadd.f32 %v1703, %v1028
        %v1706 = vsel %vm921, %v1704, -inf
        %1707 = vmax.xlane.f32.xlu0 %v1706
        %v1708 = vpop.xlane.xlu0 %1707
        %v1709 = vsel %vm921, %v1705, -inf
        %1710 = vmax.xlane.f32.xlu0 %v1709
        %v1711 = vpop.xlane.xlu0 %1710
        %v1712 = vsub.f32 %v1704, %v1708
        %v1713 = vsub.f32 %v1705, %v1711
        %v1714 = vmul.f32 %v1712, 1.442695
        %v1715 = vpow.pop %v1714
        %v1716 = vmul.f32 %v1713, 1.442695
        %v1717 = vpow.pop %v1716
        %v1718 = vsel %vm921, %v1715, 0.0
        %1719 = vadd.xlane.f32.xlu0 %v1718
        %v1720 = vpop.xlane.xlu0 %1719
        %v1721 = vsel %vm921, %v1717, 0.0
        %1722 = vadd.xlane.f32.xlu0 %v1721
        %v1723 = vpop.xlane.xlu0 %1722
        %v1724 = vrcp.pop %v1720
        %v1725 = vrcp.pop %v1723
        %v1726 = vmul.f32 %v1715, %v1724
        %v1727 = vmul.f32 %v1717, %v1725
        %v1728 = vpack.c.bf16 %v1726, %v1726
        %v1729 = vpack.c.bf16 %v1727, %v1727
        %1730 = vrot.lane.b32.xlu0 %v916, 40
        %v1731 = vpop.permute.xlu0 %1730
        %v1733 = vsel %vm921, %v1728, 0
        %v1736 = vsel %vm1062, %v1731, 0
        %1738 = vmatprep.subr.bf16.mxu0 0
        %1739 = vmatpush1.bf16.msra.mxu0 0
        %1740 = vmatprep.subr.bf16.mxu0 0
        %1741 = vmatpush1.bf16.msra.mxu0 0
        %1742 = vmatprep.subr.bf16.mxu0 0
        %1743 = vmatpush1.bf16.msra.mxu0 0
        %1744 = vmatprep.subr.bf16.mxu0 0
        %1745 = vmatpush1.bf16.msra.mxu0 0
        %1746 = vmatprep.subr.bf16.mxu0 0
        %1747 = vmatpush1.bf16.msra.mxu0 0
        %1748 = vmatprep.subr.bf16.mxu0 0
        %1749 = vmatpush1.bf16.msra.mxu0 0
        %1750 = vmatprep.subr.bf16.mxu0 0
        %1751 = vmatpush1.bf16.msra.mxu0 0
        %1752 = vmatprep.subr.bf16.mxu0 0
        %1753 = vmatpush1.bf16.msra.mxu0 %v1736
        %1754 = vmatprep.subr.bf16.mxu0 0
        %1755 = vmatpush2.bf16.msra.mxu0 0
        %1756 = vmatprep.subr.bf16.mxu0 0
        %1757 = vmatpush2.bf16.msra.mxu0 0
        %1758 = vmatprep.subr.bf16.mxu0 0
        %1759 = vmatpush2.bf16.msra.mxu0 0
        %1760 = vmatprep.subr.bf16.mxu0 0
        %1761 = vmatpush2.bf16.msra.mxu0 0
        %1762 = vmatprep.subr.bf16.mxu0 0
        %1763 = vmatpush2.bf16.msra.mxu0 0
        %1764 = vmatprep.subr.bf16.mxu0 0
        %1765 = vmatpush2.bf16.msra.mxu0 0
        %1766 = vmatprep.subr.bf16.mxu0 0
        %1767 = vmatpush2.bf16.msra.mxu0 0
        %1768 = vmatprep.subr.bf16.mxu0 0
        %1769 = vmatpush2.bf16.msra.mxu0 0
        %1770 = vmatprep.mubr.bf16.mxu0 0
        %1771 = vmatmul.mubr.bf16.gmra.mxu0 %v1733
        %v1772 = vpop.f32.mrf.mxu0
        %v1773 = vadd.f32 0.0, %v1772
        %v1774 = vpop.f32.mrf.mxu0
        %v1775 = vpop.f32.mrf.mxu0
        %v1776 = vpop.f32.mrf.mxu0
        %1777 = vdwg.mxu0
        %1778 = vrot.lane.b32.xlu0 %v917, 40
        %v1779 = vpop.permute.xlu0 %1778
        %v1781 = vsel %vm921, %v1729, 0
        %v1784 = vsel %vm1062, %v1779, 0
        %1786 = vmatprep.subr.bf16.mxu0 0
        %1787 = vmatpush1.bf16.msra.mxu0 0
        %1788 = vmatprep.subr.bf16.mxu0 0
        %1789 = vmatpush1.bf16.msra.mxu0 0
        %1790 = vmatprep.subr.bf16.mxu0 0
        %1791 = vmatpush1.bf16.msra.mxu0 0
        %1792 = vmatprep.subr.bf16.mxu0 0
        %1793 = vmatpush1.bf16.msra.mxu0 0
        %1794 = vmatprep.subr.bf16.mxu0 0
        %1795 = vmatpush1.bf16.msra.mxu0 0
        %1796 = vmatprep.subr.bf16.mxu0 0
        %1797 = vmatpush1.bf16.msra.mxu0 0
        %1798 = vmatprep.subr.bf16.mxu0 0
        %1799 = vmatpush1.bf16.msra.mxu0 0
        %1800 = vmatprep.subr.bf16.mxu0 0
        %1801 = vmatpush1.bf16.msra.mxu0 %v1784
        %1802 = vmatprep.subr.bf16.mxu0 0
        %1803 = vmatpush2.bf16.msra.mxu0 0
        %1804 = vmatprep.subr.bf16.mxu0 0
        %1805 = vmatpush2.bf16.msra.mxu0 0
        %1806 = vmatprep.subr.bf16.mxu0 0
        %1807 = vmatpush2.bf16.msra.mxu0 0
        %1808 = vmatprep.subr.bf16.mxu0 0
        %1809 = vmatpush2.bf16.msra.mxu0 0
        %1810 = vmatprep.subr.bf16.mxu0 0
        %1811 = vmatpush2.bf16.msra.mxu0 0
        %1812 = vmatprep.subr.bf16.mxu0 0
        %1813 = vmatpush2.bf16.msra.mxu0 0
        %1814 = vmatprep.subr.bf16.mxu0 0
        %1815 = vmatpush2.bf16.msra.mxu0 0
        %1816 = vmatprep.subr.bf16.mxu0 0
        %1817 = vmatpush2.bf16.msra.mxu0 0
        %1818 = vmatprep.mubr.bf16.mxu0 0
        %1819 = vmatmul.mubr.bf16.gmra.mxu0 %v1781
        %v1820 = vpop.f32.mrf.mxu0
        %v1821 = vadd.f32 0.0, %v1820
        %v1822 = vpop.f32.mrf.mxu0
        %v1823 = vpop.f32.mrf.mxu0
        %v1824 = vpop.f32.mrf.mxu0
        %1825 = vdwg.mxu0
        %1828 = vrot.lane.b32.xlu0 %v1325, 8
        %v1829 = vpop.permute.xlu0 %1828
        %1830 = vrot.lane.b32.xlu0 %v1373, 8
        %v1831 = vpop.permute.xlu0 %1830
        %1836 = vrot.lane.b32.xlu0 %v1549, 16
        %v1837 = vpop.permute.xlu0 %1836
        %1838 = vrot.lane.b32.xlu0 %v1597, 16
        %v1839 = vpop.permute.xlu0 %1838
        %1844 = vrot.lane.b32.xlu0 %v1773, 24
        %v1845 = vpop.permute.xlu0 %1844
        %1846 = vrot.lane.b32.xlu0 %v1821, 24
        %v1847 = vpop.permute.xlu0 %1846
        %v1850 = vsel %vm921, %v1101, %v1829
        %v1851 = vsel %vm921, %v1149, %v1831
        %vm1852 = vcmask 130048
        %v1853 = vsel %vm1852, %v1850, %v1837
        %v1854 = vsel %vm1852, %v1851, %v1839
        %vm1855 = vcmask 195584
        %v1856 = vsel %vm1855, %v1853, %v1845
        %v1857 = vsel %vm1855, %v1854, %v1847
        %v1858 = vpack.c.bf16 %v1857, %v1856
        %v1859 = vld [vmem:[%s756] sm:$0xf]
        %v1860 = vld [vmem:[%s756 + $0x4] sm:$0xf]
        %v1861 = vld [vmem:[%s756 + $0x8] sm:$0xf]
        %v1862 = vld [vmem:[%s756 + $0xc] sm:$0xf]
        %v1863 = vld [vmem:[%s759] sm:$0x1]
        %v1865 = vlaneseq
        %v1866 = vshrl.u32 %v1865, 7
        %v1867 = vsub.s32 0, %v1866
        %v1868 = vrot.slane %v1863, %v1867
        %v1874 = vunpack.c.l.b16 %v1859
        %v1875 = vunpack.c.l.b16 %v1860
        %v1876 = vunpack.c.l.b16 %v1861
        %v1877 = vunpack.c.l.b16 %v1862
        %v1878 = vpack.c.b16 %v1875, %v1874
        %v1879 = vpack.c.b16 %v1877, %v1876
        %v1883 = vsel %vm869, %v1858, 0
        %1885 = vmatprep.subr.bf16.mxu0 0
        %1886 = vmatpush1.bf16.msra.mxu0 0
        %1887 = vmatprep.subr.bf16.mxu0 0
        %1888 = vmatpush1.bf16.msra.mxu0 0
        %1889 = vmatprep.subr.bf16.mxu0 0
        %1890 = vmatpush1.bf16.msra.mxu0 0
        %1891 = vmatprep.subr.bf16.mxu0 0
        %1892 = vmatpush1.bf16.msra.mxu0 0
        %1893 = vmatprep.subr.bf16.mxu0 0
        %1894 = vmatpush1.bf16.msra.mxu0 0
        %1895 = vmatprep.subr.bf16.mxu0 0
        %1896 = vmatpush1.bf16.msra.mxu0 0
        %1897 = vmatprep.subr.bf16.mxu0 0
        %1898 = vmatpush1.bf16.msra.mxu0 %v1879
        %1899 = vmatprep.subr.bf16.mxu0 0
        %1900 = vmatpush1.bf16.msra.mxu0 %v1878
        %1901 = vmatprep.subr.bf16.mxu0 0
        %1902 = vmatpush2.bf16.msra.mxu0 0
        %1903 = vmatprep.subr.bf16.mxu0 0
        %1904 = vmatpush2.bf16.msra.mxu0 0
        %1905 = vmatprep.subr.bf16.mxu0 0
        %1906 = vmatpush2.bf16.msra.mxu0 0
        %1907 = vmatprep.subr.bf16.mxu0 0
        %1908 = vmatpush2.bf16.msra.mxu0 0
        %1909 = vmatprep.subr.bf16.mxu0 0
        %1910 = vmatpush2.bf16.msra.mxu0 0
        %1911 = vmatprep.subr.bf16.mxu0 0
        %1912 = vmatpush2.bf16.msra.mxu0 0
        %1913 = vmatprep.subr.bf16.mxu0 0
        %1914 = vmatpush2.bf16.msra.mxu0 0
        %1915 = vmatprep.subr.bf16.mxu0 0
        %1916 = vmatpush2.bf16.msra.mxu0 0
        %1917 = vmatprep.mubr.bf16.mxu0 0
        %1918 = vmatmul.mubr.bf16.gmra.mxu0 %v1883
        %v1919 = vpop.f32.mrf.mxu0
        %v1920 = vadd.f32 %v1868, %v1919
        %v1921 = vpop.f32.mrf.mxu0
        %v1922 = vpop.f32.mrf.mxu0
        %v1923 = vadd.f32 %v1868, %v1922
        %v1924 = vpop.f32.mrf.mxu0
        %1925 = vdwg.mxu0
        %v1926 = vadd.f32 %v1920, %v843
        %v1927 = vadd.f32 %v1923, %v844
        %v1928 = vld [vmem:[%s762] sm:$0x1]
        %v1929 = vld [vmem:[%s765] sm:$0x1]
        %v1930 = vsel %vm869, %v1926, 0.0
        %1931 = vadd.xlane.f32.xlu0 %v1930
        %v1932 = vpop.xlane.xlu0 %1931
        %v1933 = vsel %vm869, %v1927, 0.0
        %1934 = vadd.xlane.f32.xlu0 %v1933
        %v1935 = vpop.xlane.xlu0 %1934
        %v1936 = vrcp.pop 32.0
        %v1937 = vmul.f32 %v1932, %v1936
        %v1938 = vmul.f32 %v1935, %v1936
        %v1939 = vsub.f32 %v1926, %v1937
        %v1940 = vsub.f32 %v1927, %v1938
        %v1941 = vmul.f32 %v1939, %v1939
        %v1942 = vmul.f32 %v1940, %v1940
        %v1943 = vsel %vm869, %v1941, 0.0
        %1944 = vadd.xlane.f32.xlu0 %v1943
        %v1945 = vpop.xlane.xlu0 %1944
        %v1946 = vsel %vm869, %v1942, 0.0
        %1947 = vadd.xlane.f32.xlu0 %v1946
        %v1948 = vpop.xlane.xlu0 %1947
        %v1949 = vmul.f32 %v1945, %v1936
        %v1950 = vmul.f32 %v1948, %v1936
        %v1951 = vadd.f32 %v1949, 1e-12
        %v1952 = vadd.f32 %v1950, 1e-12
        %v1953 = vrsqrt.pop %v1951
        %v1954 = vrsqrt.pop %v1952
        %v1955 = vmul.f32 %v1939, %v1953
        %v1956 = vmul.f32 %v1940, %v1954
        %v1958 = vlaneseq
        %v1959 = vshrl.u32 %v1958, 7
        %v1960 = vsub.s32 0, %v1959
        %v1961 = vrot.slane %v1928, %v1960
        %v1963 = vmul.f32 %v1955, %v1961
        %v1964 = vmul.f32 %v1956, %v1961
        %v1966 = vlaneseq
        %v1967 = vshrl.u32 %v1966, 7
        %v1968 = vsub.s32 0, %v1967
        %v1969 = vrot.slane %v1929, %v1968
        %v1971 = vadd.f32 %v1963, %v1969
        %v1972 = vadd.f32 %v1964, %v1969
        %v1973 = vpack.c.bf16 %v1972, %v1971
        %v1974 = vld [vmem:[%s770] sm:$0xf]
        %v1975 = vld [vmem:[%s770 + $0x4] sm:$0xf]
        %v1976 = vld [vmem:[%s770 + $0x8] sm:$0xf]
        %v1977 = vld [vmem:[%s770 + $0xc] sm:$0xf]
        %v1978 = vld [vmem:[%s773] sm:$0x1]
        %v1980 = vlaneseq
        %v1981 = vshrl.u32 %v1980, 7
        %v1982 = vsub.s32 0, %v1981
        %v1983 = vrot.slane %v1978, %v1982
        %v1989 = vunpack.c.l.b16 %v1974
        %v1990 = vunpack.c.l.b16 %v1975
        %v1991 = vunpack.c.l.b16 %v1976
        %v1992 = vunpack.c.l.b16 %v1977
        %v1993 = vpack.c.b16 %v1990, %v1989
        %v1994 = vpack.c.b16 %v1992, %v1991
        %v1998 = vsel %vm869, %v1973, 0
        %2000 = vmatprep.subr.bf16.mxu0 0
        %2001 = vmatpush1.bf16.msra.mxu0 0
        %2002 = vmatprep.subr.bf16.mxu0 0
        %2003 = vmatpush1.bf16.msra.mxu0 0
        %2004 = vmatprep.subr.bf16.mxu0 0
        %2005 = vmatpush1.bf16.msra.mxu0 0
        %2006 = vmatprep.subr.bf16.mxu0 0
        %2007 = vmatpush1.bf16.msra.mxu0 0
        %2008 = vmatprep.subr.bf16.mxu0 0
        %2009 = vmatpush1.bf16.msra.mxu0 0
        %2010 = vmatprep.subr.bf16.mxu0 0
        %2011 = vmatpush1.bf16.msra.mxu0 0
        %2012 = vmatprep.subr.bf16.mxu0 0
        %2013 = vmatpush1.bf16.msra.mxu0 %v1994
        %2014 = vmatprep.subr.bf16.mxu0 0
        %2015 = vmatpush1.bf16.msra.mxu0 %v1993
        %2016 = vmatprep.subr.bf16.mxu0 0
        %2017 = vmatpush2.bf16.msra.mxu0 0
        %2018 = vmatprep.subr.bf16.mxu0 0
        %2019 = vmatpush2.bf16.msra.mxu0 0
        %2020 = vmatprep.subr.bf16.mxu0 0
        %2021 = vmatpush2.bf16.msra.mxu0 0
        %2022 = vmatprep.subr.bf16.mxu0 0
        %2023 = vmatpush2.bf16.msra.mxu0 0
        %2024 = vmatprep.subr.bf16.mxu0 0
        %2025 = vmatpush2.bf16.msra.mxu0 0
        %2026 = vmatprep.subr.bf16.mxu0 0
        %2027 = vmatpush2.bf16.msra.mxu0 0
        %2028 = vmatprep.subr.bf16.mxu0 0
        %2029 = vmatpush2.bf16.msra.mxu0 0
        %2030 = vmatprep.subr.bf16.mxu0 0
        %2031 = vmatpush2.bf16.msra.mxu0 0
        %2032 = vmatprep.mubr.bf16.mxu0 0
        %2033 = vmatmul.mubr.bf16.gmra.mxu0 %v1998
        %v2034 = vpop.f32.mrf.mxu0
        %v2035 = vadd.f32 %v1983, %v2034
        %v2036 = vpop.f32.mrf.mxu0
        %v2037 = vpop.f32.mrf.mxu0
        %v2038 = vadd.f32 %v1983, %v2037
        %v2039 = vpop.f32.mrf.mxu0
        %2040 = vdwg.mxu0
        %v2041 = vmul.f32 %v2035, 0.5
        %v2042 = vmul.f32 %v2038, 0.5
        %v2043 = vmul.f32 %v2035, 0.044715
        %v2044 = vmul.f32 %v2038, 0.044715
        %v2045 = vmul.f32 %v2043, %v2035
        %v2046 = vmul.f32 %v2044, %v2038
        %v2047 = vmul.f32 %v2045, %v2035
        %v2048 = vmul.f32 %v2046, %v2038
        %v2049 = vadd.f32 %v2035, %v2047
        %v2050 = vadd.f32 %v2038, %v2048
        %v2051 = vmul.f32 %v2049, 0.7978846
        %v2052 = vmul.f32 %v2050, 0.7978846
        %v2053 = vtanh.pop %v2051
        %v2054 = vtanh.pop %v2052
        %v2055 = vadd.f32 %v2053, 1.0
        %v2056 = vadd.f32 %v2054, 1.0
        %v2057 = vmul.f32 %v2041, %v2055
        %v2058 = vmul.f32 %v2042, %v2056
        %v2059 = vpack.c.bf16 %v2058, %v2057
        %v2060 = vld [vmem:[%s778] sm:$0xf]
        %v2061 = vld [vmem:[%s778 + $0x4] sm:$0xf]
        %v2062 = vld [vmem:[%s778 + $0x8] sm:$0xf]
        %v2063 = vld [vmem:[%s778 + $0xc] sm:$0xf]
        %v2064 = vld [vmem:[%s778 + $0x10] sm:$0xf]
        %v2065 = vld [vmem:[%s778 + $0x14] sm:$0xf]
        %v2066 = vld [vmem:[%s778 + $0x18] sm:$0xf]
        %v2067 = vld [vmem:[%s778 + $0x1c] sm:$0xf]
        %v2068 = vld [vmem:[%s781] sm:$0x1]
        %v2070 = vlaneseq
        %v2071 = vshrl.u32 %v2070, 7
        %v2072 = vsub.s32 0, %v2071
        %v2073 = vrot.slane %v2068, %v2072
        %v2083 = vunpack.c.l.b16 %v2060
        %v2084 = vunpack.c.l.b16 %v2061
        %v2085 = vunpack.c.l.b16 %v2062
        %v2086 = vunpack.c.l.b16 %v2063
        %v2087 = vunpack.c.l.b16 %v2064
        %v2088 = vunpack.c.l.b16 %v2065
        %v2089 = vunpack.c.l.b16 %v2066
        %v2090 = vunpack.c.l.b16 %v2067
        %v2091 = vpack.c.b16 %v2084, %v2083
        %v2092 = vpack.c.b16 %v2086, %v2085
        %v2093 = vpack.c.b16 %v2088, %v2087
        %v2094 = vpack.c.b16 %v2090, %v2089
        %vm2099 = vcmask 523264
        %v2101 = vsel %vm2099, %v2059, 0
        %2103 = vmatprep.subr.bf16.mxu0 0
        %2104 = vmatpush1.bf16.msra.mxu0 0
        %2105 = vmatprep.subr.bf16.mxu0 0
        %2106 = vmatpush1.bf16.msra.mxu0 0
        %2107 = vmatprep.subr.bf16.mxu0 0
        %2108 = vmatpush1.bf16.msra.mxu0 0
        %2109 = vmatprep.subr.bf16.mxu0 0
        %2110 = vmatpush1.bf16.msra.mxu0 0
        %2111 = vmatprep.subr.bf16.mxu0 0
        %2112 = vmatpush1.bf16.msra.mxu0 %v2094
        %2113 = vmatprep.subr.bf16.mxu0 0
        %2114 = vmatpush1.bf16.msra.mxu0 %v2093
        %2115 = vmatprep.subr.bf16.mxu0 0
        %2116 = vmatpush1.bf16.msra.mxu0 %v2092
        %2117 = vmatprep.subr.bf16.mxu0 0
        %2118 = vmatpush1.bf16.msra.mxu0 %v2091
        %2119 = vmatprep.subr.bf16.mxu0 0
        %2120 = vmatpush2.bf16.msra.mxu0 0
        %2121 = vmatprep.subr.bf16.mxu0 0
        %2122 = vmatpush2.bf16.msra.mxu0 0
        %2123 = vmatprep.subr.bf16.mxu0 0
        %2124 = vmatpush2.bf16.msra.mxu0 0
        %2125 = vmatprep.subr.bf16.mxu0 0
        %2126 = vmatpush2.bf16.msra.mxu0 0
        %2127 = vmatprep.subr.bf16.mxu0 0
        %2128 = vmatpush2.bf16.msra.mxu0 0
        %2129 = vmatprep.subr.bf16.mxu0 0
        %2130 = vmatpush2.bf16.msra.mxu0 0
        %2131 = vmatprep.subr.bf16.mxu0 0
        %2132 = vmatpush2.bf16.msra.mxu0 0
        %2133 = vmatprep.subr.bf16.mxu0 0
        %2134 = vmatpush2.bf16.msra.mxu0 0
        %2135 = vmatprep.mubr.bf16.mxu0 0
        %2136 = vmatmul.mubr.bf16.gmra.mxu0 %v2101
        %v2137 = vpop.f32.mrf.mxu0
        %v2138 = vadd.f32 %v2073, %v2137
        %v2139 = vpop.f32.mrf.mxu0
        %v2140 = vpop.f32.mrf.mxu0
        %v2141 = vadd.f32 %v2073, %v2140
        %v2142 = vpop.f32.mrf.mxu0
        %2143 = vdwg.mxu0
        %v2144 = vadd.f32 %v2138, %v1971
        %v2145 = vadd.f32 %v2141, %v1972
        %v2146 = vld [vmem:[%s784] sm:$0x1]
        %v2147 = vld [vmem:[%s787] sm:$0x1]
        %v2148 = vsel %vm869, %v2144, 0.0
        %2149 = vadd.xlane.f32.xlu0 %v2148
        %v2150 = vpop.xlane.xlu0 %2149
        %v2151 = vsel %vm869, %v2145, 0.0
        %2152 = vadd.xlane.f32.xlu0 %v2151
        %v2153 = vpop.xlane.xlu0 %2152
        %v2154 = vmul.f32 %v2150, %v1936
        %v2155 = vmul.f32 %v2153, %v1936
        %v2156 = vsub.f32 %v2144, %v2154
        %v2157 = vsub.f32 %v2145, %v2155
        %v2158 = vmul.f32 %v2156, %v2156
        %v2159 = vmul.f32 %v2157, %v2157
        %v2160 = vsel %vm869, %v2158, 0.0
        %2161 = vadd.xlane.f32.xlu0 %v2160
        %v2162 = vpop.xlane.xlu0 %2161
        %v2163 = vsel %vm869, %v2159, 0.0
        %2164 = vadd.xlane.f32.xlu0 %v2163
        %v2165 = vpop.xlane.xlu0 %2164
        %v2166 = vmul.f32 %v2162, %v1936
        %v2167 = vmul.f32 %v2165, %v1936
        %v2168 = vadd.f32 %v2166, 1e-12
        %v2169 = vadd.f32 %v2167, 1e-12
        %v2170 = vrsqrt.pop %v2168
        %v2171 = vrsqrt.pop %v2169
        %v2172 = vmul.f32 %v2156, %v2170
        %v2173 = vmul.f32 %v2157, %v2171
        %v2175 = vlaneseq
        %v2176 = vshrl.u32 %v2175, 7
        %v2177 = vsub.s32 0, %v2176
        %v2178 = vrot.slane %v2146, %v2177
        %v2180 = vmul.f32 %v2172, %v2178
        %v2181 = vmul.f32 %v2173, %v2178
        %v2183 = vlaneseq
        %v2184 = vshrl.u32 %v2183, 7
        %v2185 = vsub.s32 0, %v2184
        %v2186 = vrot.slane %v2147, %v2185
        %v2188 = vadd.f32 %v2180, %v2186
        %v2189 = vadd.f32 %v2181, %v2186
        %2190 = vst.msk [vmem:[#allocation2] sm:$0xff] %vm869, %v2188
        %2191 = vst.msk [vmem:[#allocation2 + $0x8] sm:$0xff] %vm869, %v2189
        %p2192 = scmp.eq.s32.totalorder %s32, 1
        // Predicated region
        $region105: #{bert_nli_forward.1} parent=99 // pred_check
          %p2193 = pneg %p2192
        $region106: #{bert_nli_forward.1} parent=99 // pred_check_branch
          %2195 = sbr.rel (%p2193) target = $region108
        $region107: #{bert_nli_forward.1} parent=99 // pred_region
          %v2197 = vrot.slane %v2189, 7
          %vm2199 = vcmask 1040384
          %v2200 = vsel %vm2199, %v2188, %v2197
          %v2201 = vpack.c.bf16 %v2200, %v2200
          %v2202 = vld [vmem:[%s16] sm:$0xf]
          %v2203 = vld [vmem:[%s16 + $0x4] sm:$0xf]
          %v2204 = vld [vmem:[%s16 + $0x8] sm:$0xf]
          %v2205 = vld [vmem:[%s16 + $0xc] sm:$0xf]
          %v2206 = vld [vmem:[%s17] sm:$0x1]
          %v2208 = vlaneseq
          %v2209 = vshrl.u32 %v2208, 7
          %v2210 = vsub.s32 0, %v2209
          %v2211 = vrot.slane %v2206, %v2210
          %v2217 = vunpack.c.l.b16 %v2202
          %v2218 = vunpack.c.l.b16 %v2203
          %v2219 = vunpack.c.l.b16 %v2204
          %v2220 = vunpack.c.l.b16 %v2205
          %v2221 = vpack.c.b16 %v2218, %v2217
          %v2222 = vpack.c.b16 %v2220, %v2219
          %v2226 = vsel %vm869, %v2201, 0
          %2228 = vmatprep.subr.bf16.mxu0 0
          %2229 = vmatpush1.bf16.msra.mxu0 0
          %2230 = vmatprep.subr.bf16.mxu0 0
          %2231 = vmatpush1.bf16.msra.mxu0 0
          %2232 = vmatprep.subr.bf16.mxu0 0
          %2233 = vmatpush1.bf16.msra.mxu0 0
          %2234 = vmatprep.subr.bf16.mxu0 0
          %2235 = vmatpush1.bf16.msra.mxu0 0
          %2236 = vmatprep.subr.bf16.mxu0 0
          %2237 = vmatpush1.bf16.msra.mxu0 0
          %2238 = vmatprep.subr.bf16.mxu0 0
          %2239 = vmatpush1.bf16.msra.mxu0 0
          %2240 = vmatprep.subr.bf16.mxu0 0
          %2241 = vmatpush1.bf16.msra.mxu0 %v2222
          %2242 = vmatprep.subr.bf16.mxu0 0
          %2243 = vmatpush1.bf16.msra.mxu0 %v2221
          %2244 = vmatprep.subr.bf16.mxu0 0
          %2245 = vmatpush2.bf16.msra.mxu0 0
          %2246 = vmatprep.subr.bf16.mxu0 0
          %2247 = vmatpush2.bf16.msra.mxu0 0
          %2248 = vmatprep.subr.bf16.mxu0 0
          %2249 = vmatpush2.bf16.msra.mxu0 0
          %2250 = vmatprep.subr.bf16.mxu0 0
          %2251 = vmatpush2.bf16.msra.mxu0 0
          %2252 = vmatprep.subr.bf16.mxu0 0
          %2253 = vmatpush2.bf16.msra.mxu0 0
          %2254 = vmatprep.subr.bf16.mxu0 0
          %2255 = vmatpush2.bf16.msra.mxu0 0
          %2256 = vmatprep.subr.bf16.mxu0 0
          %2257 = vmatpush2.bf16.msra.mxu0 0
          %2258 = vmatprep.subr.bf16.mxu0 0
          %2259 = vmatpush2.bf16.msra.mxu0 0
          %2260 = vmatprep.mubr.bf16.mxu0 0
          %2261 = vmatmul.mubr.bf16.gmra.mxu0 %v2226
          %v2262 = vpop.f32.mrf.mxu0
          %v2263 = vadd.f32 %v2211, %v2262
          %v2264 = vpop.f32.mrf.mxu0
          %v2265 = vpop.f32.mrf.mxu0
          %v2266 = vpop.f32.mrf.mxu0
          %2267 = vdwg.mxu0
          %v2268 = vtanh.pop %v2263
          %v2269 = vld [vmem:[%s18] sm:$0xff]
          %v2270 = vld [vmem:[%s18 + $0x8] sm:$0xff]
          %v2271 = vld [vmem:[%s18 + $0x10] sm:$0xff]
          %v2272 = vld [vmem:[%s18 + $0x18] sm:$0xff]
          %v2273 = vld [vmem:[%s19] sm:$0x1]
          %v2275 = vlaneseq
          %v2276 = vshrl.u32 %v2275, 7
          %v2277 = vsub.s32 0, %v2276
          %v2278 = vrot.slane %v2273, %v2277
          %v2281 = vsel %vm869, %v2268, 0
          %2283 = vmatprep.subr.mxu0 0.0
          %2284 = vmatpush1.msra.mxu0 0.0
          %2285 = vmatprep.subr.mxu0 0.0
          %2286 = vmatpush1.msra.mxu0 0.0
          %2287 = vmatprep.subr.mxu0 0.0
          %2288 = vmatpush1.msra.mxu0 0.0
          %2289 = vmatprep.subr.mxu0 0.0
          %2290 = vmatpush1.msra.mxu0 0.0
          %2291 = vmatprep.subr.mxu0 0.0
          %2292 = vmatpush1.msra.mxu0 0.0
          %2293 = vmatprep.subr.mxu0 0.0
          %2294 = vmatpush1.msra.mxu0 0.0
          %2295 = vmatprep.subr.mxu0 0.0
          %2296 = vmatpush1.msra.mxu0 0.0
          %2297 = vmatprep.subr.mxu0 0.0
          %2298 = vmatpush1.msra.mxu0 0.0
          %2299 = vmatprep.subr.mxu0 0.0
          %2300 = vmatpush1.msra.mxu0 0.0
          %2301 = vmatprep.subr.mxu0 0.0
          %2302 = vmatpush1.msra.mxu0 0.0
          %2303 = vmatprep.subr.mxu0 0.0
          %2304 = vmatpush1.msra.mxu0 0.0
          %2305 = vmatprep.subr.mxu0 0.0
          %2306 = vmatpush1.msra.mxu0 0.0
          %2307 = vmatprep.subr.mxu0 0.0
          %2308 = vmatpush1.msra.mxu0 %v2272
          %2309 = vmatprep.subr.mxu0 0.0
          %2310 = vmatpush1.msra.mxu0 %v2271
          %2311 = vmatprep.subr.mxu0 0.0
          %2312 = vmatpush1.msra.mxu0 %v2270
          %2313 = vmatprep.subr.mxu0 0.0
          %2314 = vmatpush1.msra.mxu0 %v2269
          %2315 = vmatprep.subr.mxu0 0.0
          %2316 = vmatpush2.msra.mxu0 0.0
          %2317 = vmatprep.subr.mxu0 0.0
          %2318 = vmatpush2.msra.mxu0 0.0
          %2319 = vmatprep.subr.mxu0 0.0
          %2320 = vmatpush2.msra.mxu0 0.0
          %2321 = vmatprep.subr.mxu0 0.0
          %2322 = vmatpush2.msra.mxu0 0.0
          %2323 = vmatprep.subr.mxu0 0.0
          %2324 = vmatpush2.msra.mxu0 0.0
          %2325 = vmatprep.subr.mxu0 0.0
          %2326 = vmatpush2.msra.mxu0 0.0
          %2327 = vmatprep.subr.mxu0 0.0
          %2328 = vmatpush2.msra.mxu0 0.0
          %2329 = vmatprep.subr.mxu0 0.0
          %2330 = vmatpush2.msra.mxu0 0.0
          %2331 = vmatprep.subr.mxu0 0.0
          %2332 = vmatpush2.msra.mxu0 0.0
          %2333 = vmatprep.subr.mxu0 0.0
          %2334 = vmatpush2.msra.mxu0 0.0
          %2335 = vmatprep.subr.mxu0 0.0
          %2336 = vmatpush2.msra.mxu0 0.0
          %2337 = vmatprep.subr.mxu0 0.0
          %2338 = vmatpush2.msra.mxu0 0.0
          %2339 = vmatprep.subr.mxu0 0.0
          %2340 = vmatpush2.msra.mxu0 0.0
          %2341 = vmatprep.subr.mxu0 0.0
          %2342 = vmatpush2.msra.mxu0 0.0
          %2343 = vmatprep.subr.mxu0 0.0
          %2344 = vmatpush2.msra.mxu0 0.0
          %2345 = vmatprep.subr.mxu0 0.0
          %2346 = vmatpush2.msra.mxu0 0.0
          %2347 = vmatprep.mubr.f32.mxu0 0.0
          %2348 = vmatmul.mubr.f32.gmra.mxu0 %v2281
          %v2349 = vpop.f32.mrf.mxu0
          %v2350 = vadd.f32 %v2278, %v2349
          %v2351 = vpop.f32.mrf.mxu0
          %2352 = vdwg.mxu0
          %vm2353 = vcmask 17408
          %2354 = vst.msk [vmem:[#allocation3] sm:$0x3] %vm2353, %v2350
        $region108: #{bert_nli_forward.1} parent=99 // pred_fallthru
          _
        // Predicated region
        $region109: #{bert_nli_forward.1} parent=99 // pred_check
          %p2355 = pneg %p525
        $region110: #{bert_nli_forward.1} parent=99 // pred_check_branch
          %2357 = sbr.rel (%p2355) target = $region112
        $region111: #{bert_nli_forward.1} parent=99 // pred_region
          %s2359 = ssub.s32 32, 32
          %2360 = vsyncadd [#allocation4], %s2359
          %s2362 = sshll.u32 [#allocation3], 4
          %s2363 = int_to_ptr.vmem [resolvable:$true] %s2362
          %2365 = dma.vmem_to_hbm [thread:$0]  %s2363, 32, %s20, [#allocation4]
        $region112: #{bert_nli_forward.1} parent=99 // pred_fallthru
          _
        // Predicated region
        $region113: #{bert_nli_forward.1} parent=99 // pred_check
          %p2366 = pneg %p525
        $region114: #{bert_nli_forward.1} parent=99 // pred_check_branch
          %2368 = sbr.rel (%p2366) target = $region116
        $region115: #{bert_nli_forward.1} parent=99 // pred_region
          %2369 = dma.done [#allocation4], 32
        $region116: #{bert_nli_forward.1} parent=99 // pred_fallthru
          _
      $region100: #{bert_nli_forward.1} parent=5 // pred_fallthru
        _
      %p2370 = scmp.le.s32.totalorder 2, %s27
      // Predicated region
      $region117: #{bert_nli_forward.1} parent=5 // pred_check
        %p2371 = pneg %p2370
      $region118: #{bert_nli_forward.1} parent=5 // pred_check_branch
        %2373 = sbr.rel (%p2371) target = $region120
      $region119: #{bert_nli_forward.1} parent=5 // pred_region
        %s2374 = ssub.s32 %s27, 2
      $region120: #{bert_nli_forward.1} parent=5 // pred_fallthru
        _
    $region6: #{bert_nli_forward.1} parent=1 // loop_footer
      %s31 = sadd.s32 1, %s27
    $region7: #{bert_nli_forward.1} parent=1 // loop_footer_branch
      %26 = sbr.rel target = $region3
    $region8: #{bert_nli_forward.1} parent=1 // loop_exit
      _
    %2375 = vsyncpa [#allocation4], 1
    %s2376 = scalar_lea.sflag [#allocation4], 1
    %2377 = vsyncpa %s2376, 1

</llo_original>
